<compile_context>
chip_gen: v5e
topology: v5e:2x2
jax: 0.10.0
libtpu: 0.0.40
codegen_flags: <defaults>
</compile_context>

<pallas_src>
import functools

import jax
import jax.numpy as jnp
from jax.experimental import pallas as pl
from jax.experimental.pallas import tpu as pltpu


def _resblock_kernel(xpad_hbm, w1_ref, b1_ref, w2_ref, b2_ref, o_ref,
                     xbuf, sem):
    # xpad_hbm: (B, H+2, W+2, Cp)  padded input, resident in HBM (pl.ANY)
    # w1_ref  : (3, 3*Cp, Cp)      bf16, rows ordered (kw, cin)
    # b1_ref  : (1, Cp)            f32
    # w2_ref  : (Cp, Cp)           bf16
    # b2_ref  : (1, Cp)            f32
    # o_ref   : (1, TH, W, Cp)     output strip
    # xbuf    : (2, TH+2, W+2, Cp) double-buffered input strip (VMEM scratch)
    # sem     : (2,)               DMA semaphores
    b = pl.program_id(0)          # batch       (parallel)
    s = pl.program_id(1)          # row strip   (sequential prefetch chain)
    n_strips = pl.num_programs(1)

    _, th, w_out, cp = o_ref.shape
    slot = s % 2

    def strip_copy(batch_idx, strip_idx, slot_idx):
        return pltpu.make_async_copy(
            xpad_hbm.at[batch_idx, pl.ds(strip_idx * th, th + 2)],
            xbuf.at[slot_idx],
            sem.at[slot_idx])

    # Prime the chain at the first strip of each batch (chain resets at s == 0,
    # so splitting the batch axis across cores stays deadlock-free).
    @pl.when(s == 0)
    def _():
        strip_copy(b, s, slot).start()

    # Prefetch the next strip of this batch while we compute the current one.
    @pl.when(s + 1 < n_strips)
    def _():
        strip_copy(b, s + 1, 1 - slot).start()

    strip_copy(b, s, slot).wait()

    xin = xbuf[slot]                                    # (TH+2, W+2, Cp) f32
    h = jnp.maximum(xin, 0.0).astype(jnp.bfloat16)      # ReLU -> bf16 MXU operand

    # 3x3 conv (stride 1, pad 1) as 3 matmuls with K = 3*Cp.
    acc = None
    for dy in range(3):
        rows = h[dy:dy + th]                            # (TH, W+2, Cp)
        patch = jnp.concatenate(
            [rows[:, 0:w_out], rows[:, 1:w_out + 1], rows[:, 2:w_out + 2]],
            axis=-1).reshape(th * w_out, 3 * cp)        # (TH*W, 3*Cp) bf16
        part = jnp.dot(patch, w1_ref[dy],
                       preferred_element_type=jnp.float32)
        acc = part if acc is None else acc + part       # f32 accumulator
    acc = acc + b1_ref[...]                             # (TH*W, Cp) f32

    acc = jnp.maximum(acc, 0.0).astype(jnp.bfloat16)    # second ReLU

    out = jnp.dot(acc, w2_ref[...], preferred_element_type=jnp.float32)
    out = out + b2_ref[...]

    # Residual from the same padded strip (no extra HBM read).
    res = xin[1:th + 1, 1:w_out + 1].reshape(th * w_out, cp).astype(jnp.float32)
    o_ref[...] = (res + out).reshape(1, th, w_out, cp).astype(o_ref.dtype)


def _pick_block_h(H, W):
    """Largest friendly divisor of H keeping the strip's matmul M-dim modest."""
    for th in (64, 32, 16, 8, 4, 2, 1):
        if th <= H and H % th == 0 and th * W <= 2048:
            return th
    return 1 if H % 1 == 0 else H


@functools.partial(jax.jit, static_argnames=("block_h",))
def resblock_nhwc(x_nhwc, w1, b1, w2, b2, block_h=None):
    """x_nhwc: (B, H, W, C);  w1: (3,3,C,C) HWIO;  b1: (C,);  w2: (C,C);  b2: (C,)."""
    B, H, W, C = x_nhwc.shape
    Cp = ((C + 127) // 128) * 128          # lane-dense channel count
    dc = Cp - C

    th = block_h if block_h is not None else _pick_block_h(H, W)
    if H % th != 0:
        raise ValueError(f"block_h={th} must divide H={H}")
    n_strips = H // th

    # Single relayout pass: spatial halo pad + channel pad (fuses with the
    # NCHW -> NHWC transpose the caller already has to do).
    x_pad = jnp.pad(x_nhwc, ((0, 0), (1, 1), (1, 1), (0, dc)))

    # Weights: zero-pad channels, fold (kw, cin) into one K = 3*Cp axis, bf16
    # for the MXU; biases stay f32.
    w1k = jnp.pad(w1, ((0, 0), (0, 0), (0, dc), (0, dc)))
    w1k = w1k.reshape(3, 3 * Cp, Cp).astype(jnp.bfloat16)
    w2p = jnp.pad(w2, ((0, dc), (0, dc))).astype(jnp.bfloat16)
    b1p = jnp.pad(b1.astype(jnp.float32), (0, dc)).reshape(1, Cp)
    b2p = jnp.pad(b2.astype(jnp.float32), (0, dc)).reshape(1, Cp)

    y = pl.pallas_call(
        _resblock_kernel,
        out_shape=jax.ShapeDtypeStruct((B, H, W, Cp), x_nhwc.dtype),
        grid_spec=pltpu.PrefetchScalarGridSpec(
            num_scalar_prefetch=0,
            grid=(B, n_strips),
            in_specs=[
                pl.BlockSpec(memory_space=pl.ANY),                 # x_pad (HBM)
                pl.BlockSpec((3, 3 * Cp, Cp), lambda b, s: (0, 0, 0)),
                pl.BlockSpec((1, Cp), lambda b, s: (0, 0)),
                pl.BlockSpec((Cp, Cp), lambda b, s: (0, 0)),
                pl.BlockSpec((1, Cp), lambda b, s: (0, 0)),
            ],
            out_specs=pl.BlockSpec((1, th, W, Cp), lambda b, s: (b, s, 0, 0)),
            scratch_shapes=[
                pltpu.VMEM((2, th + 2, W + 2, Cp), x_nhwc.dtype),  # strip dbuf
                pltpu.SemaphoreType.DMA((2,)),
            ],
        ),
        compiler_params=pltpu.CompilerParams(
            dimension_semantics=("parallel", "arbitrary"),
            vmem_limit_bytes=32 * 1024 * 1024,
        ),
    )(x_pad, w1k, b1p, w2p, b2p)

    return y[..., :C]


def resblock_nchw(x_nchw, w1, b1, w2, b2, block_h=None):
    """PyTorch-convention entry point: x is NCHW, returns NCHW."""
    x_nhwc = jnp.transpose(x_nchw, (0, 2, 3, 1))
    y = resblock_nhwc(x_nhwc, w1, b1, w2, b2, block_h=block_h)
    return jnp.transpose(y, (0, 3, 1, 2))


def _reference_nhwc(x, w1, b1, w2, b2):
    """Pure-JAX reference mirroring the kernel's bf16-operand / f32-accum math."""
    h = jax.nn.relu(x).astype(jnp.bfloat16)
    h = jax.lax.conv_general_dilated(
        h, w1.astype(jnp.bfloat16), window_strides=(1, 1), padding="SAME",
        dimension_numbers=("NHWC", "HWIO", "NHWC"),
        preferred_element_type=jnp.float32)
    h = h + b1.astype(jnp.float32)
    h = jax.nn.relu(h).astype(jnp.bfloat16)
    h = jnp.einsum("bhwc,cd->bhwd", h, w2.astype(jnp.bfloat16),
                   preferred_element_type=jnp.float32) + b2.astype(jnp.float32)
    return x + h


if __name__ == "__main__":
    B, C, H, W = 2, 4, 16, 16  # small shapes consistent with Conv2d(dim, dim, ...)
    key = jax.random.PRNGKey(0)
    k_x, k_w1, k_b1, k_w2, k_b2 = jax.random.split(key, 5)

    x_nchw = jax.random.normal(k_x, (B, C, H, W), jnp.float32)
    # kaiming-uniform-ish bounds, exact values irrelevant (synthetic weights)
    bound3 = 1.0 / jnp.sqrt(C * 9.0)
    bound1 = 1.0 / jnp.sqrt(C * 1.0)
    w1 = jax.random.uniform(k_w1, (3, 3, C, C), jnp.float32, -bound3, bound3)  # HWIO
    b1 = jax.random.uniform(k_b1, (C,), jnp.float32, -bound3, bound3)
    w2 = jax.random.uniform(k_w2, (C, C), jnp.float32, -bound1, bound1)        # (cin, cout)
    b2 = jax.random.uniform(k_b2, (C,), jnp.float32, -bound1, bound1)

    # block_h=8 -> 2 row strips per image: exercises the halo + prefetch chain.
    y = resblock_nchw(x_nchw, w1, b1, w2, b2, block_h=8)
    y = jax.block_until_ready(y)

    x_nhwc = jnp.transpose(x_nchw, (0, 2, 3, 1))
    y_ref = jnp.transpose(_reference_nhwc(x_nhwc, w1, b1, w2, b2), (0, 3, 1, 2))
    max_err = float(jnp.max(jnp.abs(y - y_ref)))
    assert jnp.allclose(y, y_ref, atol=1e-2, rtol=1e-2), (
        f"mismatch vs reference (max abs err {max_err})")

    print("KERNEL_OK")
</pallas_src>

<mosaic_0001>
module attributes {stable_mosaic.version = 11 : i64} {
  func.func @_resblock_kernel(%arg0: i32, %arg1: i32, %arg2: memref<2x18x18x128xf32, #tpu.memory_space<any>>, %arg3: memref<3x384x128xbf16, #tpu.memory_space<vmem>>, %arg4: memref<1x128xf32, #tpu.memory_space<vmem>>, %arg5: memref<128x128xbf16, #tpu.memory_space<vmem>>, %arg6: memref<1x128xf32, #tpu.memory_space<vmem>>, %arg7: memref<1x8x16x128xf32, #tpu.memory_space<vmem>>, %arg8: memref<2x10x18x128xf32, #tpu.memory_space<vmem>>, %arg9: memref<2x!tpu.dma_semaphore, #tpu.memory_space<semaphore_mem>>) attributes {dimension_semantics = [#tpu.dimension_semantics<parallel>, #tpu.dimension_semantics<arbitrary>], iteration_bounds = array<i64: 2, 2>, scalar_prefetch = 0 : i64, scratch_operands = 2 : i64, tpu.core_type = #tpu.core_type<tc>, window_params = [{}, {pipeline_mode = #tpu.pipeline_mode<synchronous>, transform_indices = @transform_1, window_bounds = array<i64: 3, 384, 128>}, {pipeline_mode = #tpu.pipeline_mode<synchronous>, transform_indices = @transform_2, window_bounds = array<i64: 1, 128>}, {pipeline_mode = #tpu.pipeline_mode<synchronous>, transform_indices = @transform_3, window_bounds = array<i64: 128, 128>}, {pipeline_mode = #tpu.pipeline_mode<synchronous>, transform_indices = @transform_4, window_bounds = array<i64: 1, 128>}, {transform_indices = @transform_5, window_bounds = array<i64: 1, 8, 16, 128>}]} {
    %c2_i32 = arith.constant 2 : i32
    %c0_i32 = arith.constant 0 : i32
    %0 = arith.cmpi eq, %c2_i32, %c0_i32 : i32
    %c1_i32 = arith.constant 1 : i32
    %1 = arith.select %0, %c1_i32, %c2_i32 : i32
    %2 = arith.remsi %arg1, %1 : i32
    %c0_i32_0 = arith.constant 0 : i32
    %3 = arith.cmpi ne, %2, %c0_i32_0 : i32
    %c0_i32_1 = arith.constant 0 : i32
    %4 = arith.cmpi slt, %2, %c0_i32_1 : i32
    %c0_i32_2 = arith.constant 0 : i32
    %5 = arith.cmpi slt, %1, %c0_i32_2 : i32
    %6 = arith.xori %4, %5 : i1
    %7 = arith.andi %6, %3 : i1
    %8 = arith.addi %2, %1 : i32
    %9 = arith.select %7, %8, %2 : i32
    %c0_i32_3 = arith.constant 0 : i32
    %10 = arith.cmpi eq, %arg1, %c0_i32_3 : i32
    %11 = arith.extui %10 : i1 to i32
    %c0_i32_4 = arith.constant 0 : i32
    %12 = arith.cmpi ne, %11, %c0_i32_4 : i32
    scf.if %12 {
      %c8_i32_37 = arith.constant 8 : i32
      %75 = arith.muli %arg1, %c8_i32_37 : i32
      %c0_i32_38 = arith.constant 0 : i32
      %c0_i32_39 = arith.constant 0 : i32
      %76 = tpu.memref_slice %arg2[%arg0, %75, %c0_i32_38, %c0_i32_39] : memref<2x18x18x128xf32, #tpu.memory_space<any>> -> memref<1x10x18x128xf32, #tpu.memory_space<any>>
      %77 = tpu.memref_squeeze %76 : memref<1x10x18x128xf32, #tpu.memory_space<any>> -> memref<10x18x128xf32, #tpu.memory_space<any>>
      %c0_i32_40 = arith.constant 0 : i32
      %c0_i32_41 = arith.constant 0 : i32
      %c0_i32_42 = arith.constant 0 : i32
      %78 = tpu.memref_slice %arg8[%9, %c0_i32_40, %c0_i32_41, %c0_i32_42] : memref<2x10x18x128xf32, #tpu.memory_space<vmem>> -> memref<1x10x18x128xf32, #tpu.memory_space<vmem>>
      %79 = tpu.memref_squeeze %78 : memref<1x10x18x128xf32, #tpu.memory_space<vmem>> -> memref<10x18x128xf32, #tpu.memory_space<vmem>>
      %80 = tpu.memref_slice %arg9[%9] : memref<2x!tpu.dma_semaphore, #tpu.memory_space<semaphore_mem>> -> memref<1x!tpu.dma_semaphore, #tpu.memory_space<semaphore_mem>>
      %81 = tpu.memref_squeeze %80 : memref<1x!tpu.dma_semaphore, #tpu.memory_space<semaphore_mem>> -> memref<!tpu.dma_semaphore, #tpu.memory_space<semaphore_mem>>
      tpu.enqueue_dma source(%77 : memref<10x18x128xf32, #tpu.memory_space<any>>) target(%79 : memref<10x18x128xf32, #tpu.memory_space<vmem>>) target_semaphore(%81 : memref<!tpu.dma_semaphore, #tpu.memory_space<semaphore_mem>>)
    } else {
    }
    %c1_i32_5 = arith.constant 1 : i32
    %13 = arith.addi %arg1, %c1_i32_5 : i32
    %c2_i32_6 = arith.constant 2 : i32
    %14 = arith.cmpi slt, %13, %c2_i32_6 : i32
    %15 = arith.extui %14 : i1 to i32
    %c0_i32_7 = arith.constant 0 : i32
    %16 = arith.cmpi ne, %15, %c0_i32_7 : i32
    scf.if %16 {
      %c1_i32_37 = arith.constant 1 : i32
      %75 = arith.addi %arg1, %c1_i32_37 : i32
      %c1_i32_38 = arith.constant 1 : i32
      %76 = arith.subi %c1_i32_38, %9 : i32
      %c8_i32_39 = arith.constant 8 : i32
      %77 = arith.muli %75, %c8_i32_39 : i32
      %c0_i32_40 = arith.constant 0 : i32
      %c0_i32_41 = arith.constant 0 : i32
      %78 = tpu.memref_slice %arg2[%arg0, %77, %c0_i32_40, %c0_i32_41] : memref<2x18x18x128xf32, #tpu.memory_space<any>> -> memref<1x10x18x128xf32, #tpu.memory_space<any>>
      %79 = tpu.memref_squeeze %78 : memref<1x10x18x128xf32, #tpu.memory_space<any>> -> memref<10x18x128xf32, #tpu.memory_space<any>>
      %c0_i32_42 = arith.constant 0 : i32
      %c0_i32_43 = arith.constant 0 : i32
      %c0_i32_44 = arith.constant 0 : i32
      %80 = tpu.memref_slice %arg8[%76, %c0_i32_42, %c0_i32_43, %c0_i32_44] : memref<2x10x18x128xf32, #tpu.memory_space<vmem>> -> memref<1x10x18x128xf32, #tpu.memory_space<vmem>>
      %81 = tpu.memref_squeeze %80 : memref<1x10x18x128xf32, #tpu.memory_space<vmem>> -> memref<10x18x128xf32, #tpu.memory_space<vmem>>
      %82 = tpu.memref_slice %arg9[%76] : memref<2x!tpu.dma_semaphore, #tpu.memory_space<semaphore_mem>> -> memref<1x!tpu.dma_semaphore, #tpu.memory_space<semaphore_mem>>
      %83 = tpu.memref_squeeze %82 : memref<1x!tpu.dma_semaphore, #tpu.memory_space<semaphore_mem>> -> memref<!tpu.dma_semaphore, #tpu.memory_space<semaphore_mem>>
      tpu.enqueue_dma source(%79 : memref<10x18x128xf32, #tpu.memory_space<any>>) target(%81 : memref<10x18x128xf32, #tpu.memory_space<vmem>>) target_semaphore(%83 : memref<!tpu.dma_semaphore, #tpu.memory_space<semaphore_mem>>)
    } else {
    }
    %c8_i32 = arith.constant 8 : i32
    %17 = arith.muli %arg1, %c8_i32 : i32
    %c0_i32_8 = arith.constant 0 : i32
    %c0_i32_9 = arith.constant 0 : i32
    %18 = tpu.memref_slice %arg2[%arg0, %17, %c0_i32_8, %c0_i32_9] : memref<2x18x18x128xf32, #tpu.memory_space<any>> -> memref<1x10x18x128xf32, #tpu.memory_space<any>>
    %19 = tpu.memref_squeeze %18 : memref<1x10x18x128xf32, #tpu.memory_space<any>> -> memref<10x18x128xf32, #tpu.memory_space<any>>
    %c0_i32_10 = arith.constant 0 : i32
    %c0_i32_11 = arith.constant 0 : i32
    %c0_i32_12 = arith.constant 0 : i32
    %20 = tpu.memref_slice %arg8[%9, %c0_i32_10, %c0_i32_11, %c0_i32_12] : memref<2x10x18x128xf32, #tpu.memory_space<vmem>> -> memref<1x10x18x128xf32, #tpu.memory_space<vmem>>
    %21 = tpu.memref_squeeze %20 : memref<1x10x18x128xf32, #tpu.memory_space<vmem>> -> memref<10x18x128xf32, #tpu.memory_space<vmem>>
    %22 = tpu.memref_slice %arg9[%9] : memref<2x!tpu.dma_semaphore, #tpu.memory_space<semaphore_mem>> -> memref<1x!tpu.dma_semaphore, #tpu.memory_space<semaphore_mem>>
    %23 = tpu.memref_squeeze %22 : memref<1x!tpu.dma_semaphore, #tpu.memory_space<semaphore_mem>> -> memref<!tpu.dma_semaphore, #tpu.memory_space<semaphore_mem>>
    tpu.wait_dma2 semaphore(%23 : memref<!tpu.dma_semaphore, #tpu.memory_space<semaphore_mem>>) src(%19 : memref<10x18x128xf32, #tpu.memory_space<any>>) dst(%21 : memref<10x18x128xf32, #tpu.memory_space<vmem>>)
    %24 = arith.index_cast %9 : i32 to index
    %c0 = arith.constant 0 : index
    %c0_13 = arith.constant 0 : index
    %c0_14 = arith.constant 0 : index
    %25 = vector.load %arg8[%24, %c0, %c0_13, %c0_14] : memref<2x10x18x128xf32, #tpu.memory_space<vmem>>, vector<1x10x18x128xf32>
    %26 = vector.shape_cast %25 : vector<1x10x18x128xf32> to vector<10x18x128xf32>
    %cst = arith.constant 0.000000e+00 : f32
    %27 = vector.broadcast %cst : f32 to vector<10x18x128xf32>
    %28 = arith.maximumf %26, %27 : vector<10x18x128xf32>
    %29 = arith.truncf %28 : vector<10x18x128xf32> to vector<10x18x128xbf16>
    %30 = vector.extract_strided_slice %29 {offsets = [0, 0, 0], sizes = [8, 18, 128], strides = [1, 1, 1]} : vector<10x18x128xbf16> to vector<8x18x128xbf16>
    %31 = vector.extract_strided_slice %30 {offsets = [0, 0, 0], sizes = [8, 16, 128], strides = [1, 1, 1]} : vector<8x18x128xbf16> to vector<8x16x128xbf16>
    %32 = vector.extract_strided_slice %30 {offsets = [0, 1, 0], sizes = [8, 16, 128], strides = [1, 1, 1]} : vector<8x18x128xbf16> to vector<8x16x128xbf16>
    %33 = vector.extract_strided_slice %30 {offsets = [0, 2, 0], sizes = [8, 16, 128], strides = [1, 1, 1]} : vector<8x18x128xbf16> to vector<8x16x128xbf16>
    %34 = tpu.concatenate %31, %32, %33 in 2 : vector<8x16x128xbf16>, vector<8x16x128xbf16>, vector<8x16x128xbf16> -> vector<8x16x384xbf16>
    %35 = vector.shape_cast %34 : vector<8x16x384xbf16> to vector<128x384xbf16>
    %c0_15 = arith.constant 0 : index
    %c0_16 = arith.constant 0 : index
    %c0_17 = arith.constant 0 : index
    %36 = vector.load %arg3[%c0_15, %c0_16, %c0_17] : memref<3x384x128xbf16, #tpu.memory_space<vmem>>, vector<1x384x128xbf16>
    %37 = vector.shape_cast %36 : vector<1x384x128xbf16> to vector<384x128xbf16>
    %cst_18 = arith.constant dense<0.000000e+00> : vector<128x128xf32>
    %38 = tpu.matmul %35, %37, %cst_18 {dimension_numbers = #tpu.dot_dimension_numbers<[1], [0], [0], [1], [0, 0, 1, 1], [], []>} : vector<128x384xbf16>, vector<384x128xbf16>, vector<128x128xf32> -> vector<128x128xf32>
    %39 = vector.extract_strided_slice %29 {offsets = [1, 0, 0], sizes = [8, 18, 128], strides = [1, 1, 1]} : vector<10x18x128xbf16> to vector<8x18x128xbf16>
    %40 = vector.extract_strided_slice %39 {offsets = [0, 0, 0], sizes = [8, 16, 128], strides = [1, 1, 1]} : vector<8x18x128xbf16> to vector<8x16x128xbf16>
    %41 = vector.extract_strided_slice %39 {offsets = [0, 1, 0], sizes = [8, 16, 128], strides = [1, 1, 1]} : vector<8x18x128xbf16> to vector<8x16x128xbf16>
    %42 = vector.extract_strided_slice %39 {offsets = [0, 2, 0], sizes = [8, 16, 128], strides = [1, 1, 1]} : vector<8x18x128xbf16> to vector<8x16x128xbf16>
    %43 = tpu.concatenate %40, %41, %42 in 2 : vector<8x16x128xbf16>, vector<8x16x128xbf16>, vector<8x16x128xbf16> -> vector<8x16x384xbf16>
    %44 = vector.shape_cast %43 : vector<8x16x384xbf16> to vector<128x384xbf16>
    %c1 = arith.constant 1 : index
    %c0_19 = arith.constant 0 : index
    %c0_20 = arith.constant 0 : index
    %45 = vector.load %arg3[%c1, %c0_19, %c0_20] : memref<3x384x128xbf16, #tpu.memory_space<vmem>>, vector<1x384x128xbf16>
    %46 = vector.shape_cast %45 : vector<1x384x128xbf16> to vector<384x128xbf16>
    %cst_21 = arith.constant dense<0.000000e+00> : vector<128x128xf32>
    %47 = tpu.matmul %44, %46, %cst_21 {dimension_numbers = #tpu.dot_dimension_numbers<[1], [0], [0], [1], [0, 0, 1, 1], [], []>} : vector<128x384xbf16>, vector<384x128xbf16>, vector<128x128xf32> -> vector<128x128xf32>
    %48 = arith.addf %38, %47 : vector<128x128xf32>
    %49 = vector.extract_strided_slice %29 {offsets = [2, 0, 0], sizes = [8, 18, 128], strides = [1, 1, 1]} : vector<10x18x128xbf16> to vector<8x18x128xbf16>
    %50 = vector.extract_strided_slice %49 {offsets = [0, 0, 0], sizes = [8, 16, 128], strides = [1, 1, 1]} : vector<8x18x128xbf16> to vector<8x16x128xbf16>
    %51 = vector.extract_strided_slice %49 {offsets = [0, 1, 0], sizes = [8, 16, 128], strides = [1, 1, 1]} : vector<8x18x128xbf16> to vector<8x16x128xbf16>
    %52 = vector.extract_strided_slice %49 {offsets = [0, 2, 0], sizes = [8, 16, 128], strides = [1, 1, 1]} : vector<8x18x128xbf16> to vector<8x16x128xbf16>
    %53 = tpu.concatenate %50, %51, %52 in 2 : vector<8x16x128xbf16>, vector<8x16x128xbf16>, vector<8x16x128xbf16> -> vector<8x16x384xbf16>
    %54 = vector.shape_cast %53 : vector<8x16x384xbf16> to vector<128x384xbf16>
    %c2 = arith.constant 2 : index
    %c0_22 = arith.constant 0 : index
    %c0_23 = arith.constant 0 : index
    %55 = vector.load %arg3[%c2, %c0_22, %c0_23] : memref<3x384x128xbf16, #tpu.memory_space<vmem>>, vector<1x384x128xbf16>
    %56 = vector.shape_cast %55 : vector<1x384x128xbf16> to vector<384x128xbf16>
    %cst_24 = arith.constant dense<0.000000e+00> : vector<128x128xf32>
    %57 = tpu.matmul %54, %56, %cst_24 {dimension_numbers = #tpu.dot_dimension_numbers<[1], [0], [0], [1], [0, 0, 1, 1], [], []>} : vector<128x384xbf16>, vector<384x128xbf16>, vector<128x128xf32> -> vector<128x128xf32>
    %58 = arith.addf %48, %57 : vector<128x128xf32>
    %c0_25 = arith.constant 0 : index
    %c0_26 = arith.constant 0 : index
    %59 = vector.load %arg4[%c0_25, %c0_26] : memref<1x128xf32, #tpu.memory_space<vmem>>, vector<1x128xf32>
    %60 = vector.broadcast %59 : vector<1x128xf32> to vector<128x128xf32>
    %61 = arith.addf %58, %60 : vector<128x128xf32>
    %cst_27 = arith.constant 0.000000e+00 : f32
    %62 = vector.broadcast %cst_27 : f32 to vector<128x128xf32>
    %63 = arith.maximumf %61, %62 : vector<128x128xf32>
    %64 = arith.truncf %63 : vector<128x128xf32> to vector<128x128xbf16>
    %c0_28 = arith.constant 0 : index
    %c0_29 = arith.constant 0 : index
    %65 = vector.load %arg5[%c0_28, %c0_29] : memref<128x128xbf16, #tpu.memory_space<vmem>>, vector<128x128xbf16>
    %cst_30 = arith.constant dense<0.000000e+00> : vector<128x128xf32>
    %66 = tpu.matmul %64, %65, %cst_30 {dimension_numbers = #tpu.dot_dimension_numbers<[1], [0], [0], [1], [0, 0, 1, 1], [], []>} : vector<128x128xbf16>, vector<128x128xbf16>, vector<128x128xf32> -> vector<128x128xf32>
    %c0_31 = arith.constant 0 : index
    %c0_32 = arith.constant 0 : index
    %67 = vector.load %arg6[%c0_31, %c0_32] : memref<1x128xf32, #tpu.memory_space<vmem>>, vector<1x128xf32>
    %68 = vector.broadcast %67 : vector<1x128xf32> to vector<128x128xf32>
    %69 = arith.addf %66, %68 : vector<128x128xf32>
    %70 = vector.extract_strided_slice %26 {offsets = [1, 1, 0], sizes = [8, 16, 128], strides = [1, 1, 1]} : vector<10x18x128xf32> to vector<8x16x128xf32>
    %71 = vector.shape_cast %70 : vector<8x16x128xf32> to vector<128x128xf32>
    %72 = arith.addf %71, %69 : vector<128x128xf32>
    %73 = vector.shape_cast %72 : vector<128x128xf32> to vector<1x8x16x128xf32>
    %c0_33 = arith.constant 0 : index
    %c0_34 = arith.constant 0 : index
    %c0_35 = arith.constant 0 : index
    %c0_36 = arith.constant 0 : index
    %74 = vector.load %arg7[%c0_33, %c0_34, %c0_35, %c0_36] : memref<1x8x16x128xf32, #tpu.memory_space<vmem>>, vector<1x8x16x128xf32>
    tpu.vector_store %arg7[%c0_33, %c0_34, %c0_35, %c0_36], %73 {strides = array<i32>} : memref<1x8x16x128xf32, #tpu.memory_space<vmem>>, vector<1x8x16x128xf32>,
    return
  }
  func.func @transform_1(%arg0: i32, %arg1: i32) -> (i32, i32, i32) {
    %c0_i32 = arith.constant 0 : i32
    %c0_i32_0 = arith.constant 0 : i32
    %c0_i32_1 = arith.constant 0 : i32
    %c0_i32_2 = arith.constant 0 : i32
    return %c0_i32, %c0_i32_0, %c0_i32_1 : i32, i32, i32
  }
  func.func @transform_2(%arg0: i32, %arg1: i32) -> (i32, i32) {
    %c0_i32 = arith.constant 0 : i32
    %c0_i32_0 = arith.constant 0 : i32
    %c0_i32_1 = arith.constant 0 : i32
    return %c0_i32, %c0_i32_0 : i32, i32
  }
  func.func @transform_3(%arg0: i32, %arg1: i32) -> (i32, i32) {
    %c0_i32 = arith.constant 0 : i32
    %c0_i32_0 = arith.constant 0 : i32
    %c0_i32_1 = arith.constant 0 : i32
    return %c0_i32, %c0_i32_0 : i32, i32
  }
  func.func @transform_4(%arg0: i32, %arg1: i32) -> (i32, i32) {
    %c0_i32 = arith.constant 0 : i32
    %c0_i32_0 = arith.constant 0 : i32
    %c0_i32_1 = arith.constant 0 : i32
    return %c0_i32, %c0_i32_0 : i32, i32
  }
  func.func @transform_5(%arg0: i32, %arg1: i32) -> (i32, i32, i32, i32) {
    %c0_i32 = arith.constant 0 : i32
    %c0_i32_0 = arith.constant 0 : i32
    %c0_i32_1 = arith.constant 0 : i32
    return %arg0, %arg1, %c0_i32, %c0_i32_0 : i32, i32, i32, i32
  }
}

</mosaic_0001>

<llo_original>
// kernel: resblock_nhwc.1
$region0: #{resblock_nhwc.1}
  #allocation0 [shape = 'u32[]', space=smem, size = 0x4, offset = 0x4, fixed_abs, tag = 'smem constant byte address 0x4 - core index']
  #allocation1 [shape = 'u32[72,128]{1,0:T(1,128)}', space=vmem, size = 0x9000, scoped, tag = 'internal scratch']
  #allocation2 [shape = 'f32[2,10,18,128]{3,2,1,0:T(8,128)}', space=vmem, size = 0x3c000, scoped, tag = 'scratch operand']
  #allocation3 [shape = 's32[2]{0}', space=sflag, size = 0x8, scoped, tag = 'scratch operand']
  #allocation4 [shape = 's32[]', space=sflag, size = 0x4, offset = 0, fixed_abs, tag = 'sflag constant byte address 0x0 - dummy sync flag']
  #allocation5 [shape = 's32[]', space=sflag, size = 0x4, offset = 0, fixed_abs, tag = 'sflag constant byte address 0x0 - dummy sync flag']
  %s0 = inlined_call_operand.vmem [shape: f32[2,18,18,128], index: 0, kind: input, shape index: {}]
  %s1 = inlined_call_operand.vmem [shape: bf16[3,384,128], index: 1, kind: input, shape index: {}]
  %s2 = inlined_call_operand.vmem [shape: f32[1,128], index: 2, kind: input, shape index: {}]
  %s3 = inlined_call_operand.vmem [shape: bf16[128,128], index: 3, kind: input, shape index: {}]
  %s4 = inlined_call_operand.vmem [shape: f32[1,128], index: 4, kind: input, shape index: {}]
  %s5 = inlined_call_operand.vmem [shape: f32[2,16,16,128], index: 5, kind: output, shape index: {}]
  %s6 = sld [smem:[#allocation0]]
  $region101: #{resblock_nhwc.1} parent=0
    _
  %s8 = ssub.s32 1, %s6
  %s9 = scalar_select 0, %s8, %s6
  loop: start=0, step=1, limit=6
  $region2: #{resblock_nhwc.1} parent=0 // loop_pre_header
    _
  $region3: #{resblock_nhwc.1} parent=0 // loop_header
    %s11 = sphi 0, %s15
    %p12 = scmp.ge.s32.totalorder %s11, 6
    %s18 = sphi 0, %s30
    %s19 = sphi 0, %s26
    %s20 = sphi 0, %s18
    %s21 = sphi 0, %s19
    %s22 = sphi 0, %s20
    %s23 = sphi 0, %s21
    %s31 = sphi 0, %s31
    %s33 = sphi 0, %s31
    %s34 = sphi 0, %s33
    %s48 = sphi 0, %s34
    %s52 = sphi 0, %s52
    %s54 = sphi 0, %s52
    %s55 = sphi 0, %s54
    %s69 = sphi 0, %s55
    %s73 = sphi 0, %s73
    %s75 = sphi 0, %s73
    %s76 = sphi 0, %s75
    %s90 = sphi 0, %s76
    %s94 = sphi 0, %s94
    %s96 = sphi 0, %s94
    %s97 = sphi 0, %s96
    %s111 = sphi 0, %s97
    %s119 = sphi 0, %s121
    %s122 = sphi 0, %s119
    %s123 = sphi 0, %s122
    %s139 = sphi 0, %s123
  $region4: #{resblock_nhwc.1} parent=0 // loop_header_branch
    %14 = sbr.rel (%p12) target = $region8
  $region5: #{resblock_nhwc.1} parent=0 // loop_body
    %s16 = ssub.s32 %s11, 1
    %s17 = ssub.s32 %s11, 2
    %s24 = sadd.s32 1, %s19
    %p25 = scmp.ge.s32.totalorder %s24, 2
    %s26 = scalar_select %p25, 0, %s24
    %s27 = sadd.s32 1, %s18
    %s28 = scalar_select %p25, %s27, %s18
    %p29 = scmp.ge.s32.totalorder %s28, 2
    %s30 = scalar_select %p29, 0, %s28
    %s32 = sadd.s32 %s31, 1
    %p35 = scmp.eq.s32.totalorder %s11, 3
    %p36 = scmp.ne.s32.totalorder %s31, %s33
    %p37 = scmp.eq.s32.totalorder %s11, 0
    %p38 = por %p36, %p37
    %p39 = scmp.ne.s32.totalorder %s31, %s33
    %p40 = scmp.eq.s32.totalorder %s16, 3
    %p41 = por %p39, %p40
    %p42 = scmp.ne.s32.totalorder %s33, %s34
    %p43 = scmp.eq.s32.totalorder %s16, 0
    %p44 = por %p42, %p43
    %p45 = scmp.ne.s32.totalorder %s33, %s34
    %p46 = scmp.eq.s32.totalorder %s17, 3
    %p47 = por %p45, %p46
    %p49 = scmp.ne.s32.totalorder %s34, %s48
    %p50 = scmp.eq.s32.totalorder %s17, 0
    %p51 = por %p49, %p50
    %s53 = sadd.s32 %s52, 1
    %p56 = scmp.eq.s32.totalorder %s11, 3
    %p57 = scmp.ne.s32.totalorder %s52, %s54
    %p58 = scmp.eq.s32.totalorder %s11, 0
    %p59 = por %p57, %p58
    %p60 = scmp.ne.s32.totalorder %s52, %s54
    %p61 = scmp.eq.s32.totalorder %s16, 3
    %p62 = por %p60, %p61
    %p63 = scmp.ne.s32.totalorder %s54, %s55
    %p64 = scmp.eq.s32.totalorder %s16, 0
    %p65 = por %p63, %p64
    %p66 = scmp.ne.s32.totalorder %s54, %s55
    %p67 = scmp.eq.s32.totalorder %s17, 3
    %p68 = por %p66, %p67
    %p70 = scmp.ne.s32.totalorder %s55, %s69
    %p71 = scmp.eq.s32.totalorder %s17, 0
    %p72 = por %p70, %p71
    %s74 = sadd.s32 %s73, 1
    %p77 = scmp.eq.s32.totalorder %s11, 3
    %p78 = scmp.ne.s32.totalorder %s73, %s75
    %p79 = scmp.eq.s32.totalorder %s11, 0
    %p80 = por %p78, %p79
    %p81 = scmp.ne.s32.totalorder %s73, %s75
    %p82 = scmp.eq.s32.totalorder %s16, 3
    %p83 = por %p81, %p82
    %p84 = scmp.ne.s32.totalorder %s75, %s76
    %p85 = scmp.eq.s32.totalorder %s16, 0
    %p86 = por %p84, %p85
    %p87 = scmp.ne.s32.totalorder %s75, %s76
    %p88 = scmp.eq.s32.totalorder %s17, 3
    %p89 = por %p87, %p88
    %p91 = scmp.ne.s32.totalorder %s76, %s90
    %p92 = scmp.eq.s32.totalorder %s17, 0
    %p93 = por %p91, %p92
    %s95 = sadd.s32 %s94, 1
    %p98 = scmp.eq.s32.totalorder %s11, 3
    %p99 = scmp.ne.s32.totalorder %s94, %s96
    %p100 = scmp.eq.s32.totalorder %s11, 0
    %p101 = por %p99, %p100
    %p102 = scmp.ne.s32.totalorder %s94, %s96
    %p103 = scmp.eq.s32.totalorder %s16, 3
    %p104 = por %p102, %p103
    %p105 = scmp.ne.s32.totalorder %s96, %s97
    %p106 = scmp.eq.s32.totalorder %s16, 0
    %p107 = por %p105, %p106
    %p108 = scmp.ne.s32.totalorder %s96, %s97
    %p109 = scmp.eq.s32.totalorder %s17, 3
    %p110 = por %p108, %p109
    %p112 = scmp.ne.s32.totalorder %s97, %s111
    %p113 = scmp.eq.s32.totalorder %s17, 0
    %p114 = por %p112, %p113
    %s115 = ssub.s32 %s18, %s30
    %s116 = ssub.s32 %s19, %s26
    %s117 = sor.u32 %s115, %s116
    %p118 = scmp.eq.s32.totalorder %s117, 0
    %s120 = sadd.s32 %s119, 1
    %s121 = scalar_select %p118, %s119, %s120
    %p124 = pneg %p118
    %p125 = scmp.eq.s32.totalorder %s11, 3
    %p126 = por %p124, %p125
    %p127 = scmp.ne.s32.totalorder %s119, %s122
    %p128 = scmp.eq.s32.totalorder %s11, 0
    %p129 = por %p127, %p128
    %p130 = scmp.ne.s32.totalorder %s119, %s122
    %p131 = scmp.eq.s32.totalorder %s16, 3
    %p132 = por %p130, %p131
    %p133 = scmp.ne.s32.totalorder %s122, %s123
    %p134 = scmp.eq.s32.totalorder %s16, 0
    %p135 = por %p133, %p134
    %p136 = scmp.ne.s32.totalorder %s122, %s123
    %p137 = scmp.eq.s32.totalorder %s17, 3
    %p138 = por %p136, %p137
    %p140 = scmp.ne.s32.totalorder %s123, %s139
    %p141 = scmp.eq.s32.totalorder %s17, 0
    %p142 = por %p140, %p141
    %p143 = scmp.le.s32.totalorder 1, %s11
    %p144 = scmp.lt.s32.totalorder %s11, 5
    %p145 = pnand %p143, %p144
    %p146 = pneg %p145
    // Predicated region
    $region9: #{resblock_nhwc.1} parent=5 // pred_check
      _
    $region10: #{resblock_nhwc.1} parent=5 // pred_check_branch
      %148 = sbr.rel (%p145) target = $region12
    $region11: #{resblock_nhwc.1} parent=5 // pred_region
      %s149 = ssub.s32 %s11, 1
      // Predicated region
      $region13: #{resblock_nhwc.1} parent=11 // pred_check
        %p150 = pneg %p44
      $region14: #{resblock_nhwc.1} parent=11 // pred_check_branch
        %152 = sbr.rel (%p150) target = $region16
      $region15: #{resblock_nhwc.1} parent=11 // pred_region
        _
      $region16: #{resblock_nhwc.1} parent=11 // pred_fallthru
        _
      // Predicated region
      $region17: #{resblock_nhwc.1} parent=11 // pred_check
        %p153 = pneg %p65
      $region18: #{resblock_nhwc.1} parent=11 // pred_check_branch
        %155 = sbr.rel (%p153) target = $region20
      $region19: #{resblock_nhwc.1} parent=11 // pred_region
        _
      $region20: #{resblock_nhwc.1} parent=11 // pred_fallthru
        _
      // Predicated region
      $region21: #{resblock_nhwc.1} parent=11 // pred_check
        %p156 = pneg %p86
      $region22: #{resblock_nhwc.1} parent=11 // pred_check_branch
        %158 = sbr.rel (%p156) target = $region24
      $region23: #{resblock_nhwc.1} parent=11 // pred_region
        _
      $region24: #{resblock_nhwc.1} parent=11 // pred_fallthru
        _
      // Predicated region
      $region25: #{resblock_nhwc.1} parent=11 // pred_check
        %p159 = pneg %p107
      $region26: #{resblock_nhwc.1} parent=11 // pred_check_branch
        %161 = sbr.rel (%p159) target = $region28
      $region27: #{resblock_nhwc.1} parent=11 // pred_region
        _
      $region28: #{resblock_nhwc.1} parent=11 // pred_fallthru
        _
    $region12: #{resblock_nhwc.1} parent=5 // pred_fallthru
      _
    %p162 = scmp.lt.s32.totalorder %s11, 4
    // Predicated region
    $region29: #{resblock_nhwc.1} parent=5 // pred_check
      %p163 = pneg %p162
    $region30: #{resblock_nhwc.1} parent=5 // pred_check_branch
      %165 = sbr.rel (%p163) target = $region32
    $region31: #{resblock_nhwc.1} parent=5 // pred_region
      _
    $region32: #{resblock_nhwc.1} parent=5 // pred_fallthru
      _
    %p166 = scmp.le.s32.totalorder 1, %s11
    %p167 = scmp.lt.s32.totalorder %s11, 5
    %p168 = pnand %p166, %p167
    %p169 = pneg %p168
    // Predicated region
    $region33: #{resblock_nhwc.1} parent=5 // pred_check
      _
    $region34: #{resblock_nhwc.1} parent=5 // pred_check_branch
      %171 = sbr.rel (%p168) target = $region36
    $region35: #{resblock_nhwc.1} parent=5 // pred_region
      %s172 = ssub.s32 %s11, 1
      %p173 = pneg %p44
      %p174 = pneg %p41
      %p175 = pneg %p65
      %p176 = pneg %p62
      %p177 = pneg %p86
      %p178 = pneg %p83
      %p179 = pneg %p107
      %p180 = pneg %p104
      %p181 = pneg %p135
      %p182 = pneg %p132
      %s183 = smul.u32 8, %s21
      %p184 = scmp.lt.s32.totalorder %s20, 1
      %s185 = scalar_select %p184, %s20, 1
      %p186 = scmp.lt.s32.totalorder %s183, 15
      %s187 = scalar_select %p186, %s183, 15
      %s188 = smul.addr %s187, 2
      %s189 = smul.addr %s185, 32
      %s190 = sadd.s32 %s188, %s189
      %s191 = smul.addr %s190, 8
      %s192 = scalar_lea.vmem %s5, %s191
      %s193 = smul.u32 8, %s21
      %p194 = scmp.lt.s32.totalorder %s20, 1
      %s195 = scalar_select %p194, %s20, 1
      %p196 = scmp.lt.s32.totalorder %s193, 15
      %s197 = scalar_select %p196, %s193, 15
      %s198 = smul.addr %s197, 2
      %s199 = smul.addr %s195, 32
      %s200 = sadd.s32 %s198, %s199
      %s201 = smul.addr %s200, 8
      %s202 = scalar_lea.vmem %s5, %s201
      %s203 = smul.u32 8, %s21
      %p204 = scmp.lt.s32.totalorder %s21, 0
      %s205 = ssub.s32 0, %s21
      %s206 = scalar_select %p204, %s205, %s21
      %s207 = sand.u32 %s206, 1
      %s208 = ssub.s32 0, %s207
      %s209 = scalar_select %p204, %s208, %s207
      %p210 = scmp.ne.s32.totalorder %s209, 0
      %p211 = scmp.lt.s32.totalorder %s209, 0
      %p212 = pnand %p211, %p210
      %p213 = pneg %p212
      %s214 = sadd.s32 %s209, 2
      %s215 = scalar_select %p213, %s214, %s209
      %p216 = scmp.eq.s32.totalorder %s21, 0
      // Predicated region
      $region37: #{resblock_nhwc.1} parent=35 // pred_check
        %p217 = pneg %p216
      $region38: #{resblock_nhwc.1} parent=35 // pred_check_branch
        %219 = sbr.rel (%p217) target = $region40
      $region39: #{resblock_nhwc.1} parent=35 // pred_region
        %s220 = smul.u32 %s21, 8
        %s221 = smul.u32 %s220, 24
        %s222 = smul.u32 %s20, 432
        %s223 = sadd.s32 %s221, %s222
        %s224 = scalar_lea.vmem %s0, %s223
        %s225 = smul.u32 %s215, 240
        %s226 = scalar_lea.vmem [#allocation2], %s225
        %s227 = scalar_lea.sflag [#allocation3], %s215
        // Predicated region
        $region41: #{resblock_nhwc.1} parent=39 // pred_check
          _
        $region42: #{resblock_nhwc.1} parent=39 // pred_check_branch
          %229 = sbr.rel (0) target = $region44
        $region43: #{resblock_nhwc.1} parent=39 // pred_region
          %s230 = scalar_lea.vmem %s224, 16
          %s231 = scalar_lea.vmem %s226, 16 [#allocation2]
          loop: start=0, step=1, limit=1
          $region45: #{resblock_nhwc.1} parent=43 // loop_pre_header
            _
          $region46: #{resblock_nhwc.1} parent=43 // loop_header
            %s233 = sphi 0, %s237
            %p234 = scmp.ge.s32.totalorder %s233, 1
            %s238 = sphi %s224, %s224
            %s239 = sphi %s226, %s226
          $region47: #{resblock_nhwc.1} parent=43 // loop_header_branch
            %236 = sbr.rel (%p234) target = $region51
          $region48: #{resblock_nhwc.1} parent=43 // loop_body
            %v240 = vld [vmem:[%s238] sm:$0xff]
            %241 = vst [vmem:[%s239] sm:$0xff] %v240
            %v242 = vld [vmem:[%s238 + $0x8] sm:$0xff]
            %243 = vst [vmem:[%s239 + $0x8] sm:$0xff] %v242
            %v244 = vld [vmem:[%s238 + $0x18] sm:$0xff]
            %245 = vst [vmem:[%s239 + $0x18] sm:$0xff] %v244
            %v246 = vld [vmem:[%s238 + $0x20] sm:$0xff]
            %247 = vst [vmem:[%s239 + $0x20] sm:$0xff] %v246
            %v248 = vld [vmem:[%s238 + $0x30] sm:$0xff]
            %249 = vst [vmem:[%s239 + $0x30] sm:$0xff] %v248
            %v250 = vld [vmem:[%s238 + $0x38] sm:$0xff]
            %251 = vst [vmem:[%s239 + $0x38] sm:$0xff] %v250
            %v252 = vld [vmem:[%s238 + $0x48] sm:$0xff]
            %253 = vst [vmem:[%s239 + $0x48] sm:$0xff] %v252
            %v254 = vld [vmem:[%s238 + $0x50] sm:$0xff]
            %255 = vst [vmem:[%s239 + $0x50] sm:$0xff] %v254
            %v256 = vld [vmem:[%s238 + $0x60] sm:$0xff]
            %257 = vst [vmem:[%s239 + $0x60] sm:$0xff] %v256
            %v258 = vld [vmem:[%s238 + $0x68] sm:$0xff]
            %259 = vst [vmem:[%s239 + $0x68] sm:$0xff] %v258
            %v260 = vld [vmem:[%s238 + $0x78] sm:$0xff]
            %261 = vst [vmem:[%s239 + $0x78] sm:$0xff] %v260
            %v262 = vld [vmem:[%s238 + $0x80] sm:$0xff]
            %263 = vst [vmem:[%s239 + $0x80] sm:$0xff] %v262
            %v264 = vld [vmem:[%s238 + $0x90] sm:$0xff]
            %265 = vst [vmem:[%s239 + $0x90] sm:$0xff] %v264
            %v266 = vld [vmem:[%s238 + $0x98] sm:$0xff]
            %267 = vst [vmem:[%s239 + $0x98] sm:$0xff] %v266
            %v268 = vld [vmem:[%s238 + $0xa8] sm:$0xff]
            %269 = vst [vmem:[%s239 + $0xa8] sm:$0xff] %v268
            %v270 = vld [vmem:[%s238 + $0xb0] sm:$0xff]
            %271 = vst [vmem:[%s239 + $0xb0] sm:$0xff] %v270
            %v272 = vld [vmem:[%s238 + $0xc0] sm:$0xff]
            %273 = vst [vmem:[%s239 + $0xc0] sm:$0xff] %v272
            %v274 = vld [vmem:[%s238 + $0xc8] sm:$0xff]
            %275 = vst [vmem:[%s239 + $0xc8] sm:$0xff] %v274
            %v276 = vld [vmem:[%s238 + $0xd8] sm:$0xff]
            %277 = vst [vmem:[%s239 + $0xd8] sm:$0xff] %v276
            %v278 = vld [vmem:[%s238 + $0xe0] sm:$0xff]
            %279 = vst [vmem:[%s239 + $0xe0] sm:$0xff] %v278
          $region49: #{resblock_nhwc.1} parent=43 // loop_footer
            %s237 = sadd.s32 1, %s233
          $region50: #{resblock_nhwc.1} parent=43 // loop_footer_branch
            %232 = sbr.rel target = $region46
          $region51: #{resblock_nhwc.1} parent=43 // loop_exit
            _
          %s281 = ssub.s32 4, 1
          loop: start=0, step=1, limit=1
          $region52: #{resblock_nhwc.1} parent=43 // loop_pre_header
            _
          $region53: #{resblock_nhwc.1} parent=43 // loop_header
            %s283 = sphi 0, %s287
            %p284 = scmp.ge.s32.totalorder %s283, 1
            %s288 = sphi %s230, %s230
            %s289 = sphi %s231, %s231
          $region54: #{resblock_nhwc.1} parent=43 // loop_header_branch
            %286 = sbr.rel (%p284) target = $region58
          $region55: #{resblock_nhwc.1} parent=43 // loop_body
            %v290 = vld [vmem:[%s288] sm:%s281]
            %291 = vst [vmem:[%s289] sm:%s281] %v290
            %v292 = vld [vmem:[%s288 + $0x18] sm:%s281]
            %293 = vst [vmem:[%s289 + $0x18] sm:%s281] %v292
            %v294 = vld [vmem:[%s288 + $0x30] sm:%s281]
            %295 = vst [vmem:[%s289 + $0x30] sm:%s281] %v294
            %v296 = vld [vmem:[%s288 + $0x48] sm:%s281]
            %297 = vst [vmem:[%s289 + $0x48] sm:%s281] %v296
            %v298 = vld [vmem:[%s288 + $0x60] sm:%s281]
            %299 = vst [vmem:[%s289 + $0x60] sm:%s281] %v298
            %v300 = vld [vmem:[%s288 + $0x78] sm:%s281]
            %301 = vst [vmem:[%s289 + $0x78] sm:%s281] %v300
            %v302 = vld [vmem:[%s288 + $0x90] sm:%s281]
            %303 = vst [vmem:[%s289 + $0x90] sm:%s281] %v302
            %v304 = vld [vmem:[%s288 + $0xa8] sm:%s281]
            %305 = vst [vmem:[%s289 + $0xa8] sm:%s281] %v304
            %v306 = vld [vmem:[%s288 + $0xc0] sm:%s281]
            %307 = vst [vmem:[%s289 + $0xc0] sm:%s281] %v306
            %v308 = vld [vmem:[%s288 + $0xd8] sm:%s281]
            %309 = vst [vmem:[%s289 + $0xd8] sm:%s281] %v308
          $region56: #{resblock_nhwc.1} parent=43 // loop_footer
            %s287 = sadd.s32 1, %s283
          $region57: #{resblock_nhwc.1} parent=43 // loop_footer_branch
            %282 = sbr.rel target = $region53
          $region58: #{resblock_nhwc.1} parent=43 // loop_exit
            _
        $region44: #{resblock_nhwc.1} parent=39 // pred_fallthru
          _
        // Predicated region
        $region59: #{resblock_nhwc.1} parent=39 // pred_check
          _
        $region60: #{resblock_nhwc.1} parent=39 // pred_check_branch
          %312 = sbr.rel (0) target = $region62
        $region61: #{resblock_nhwc.1} parent=39 // pred_region
          %313 = vsyncadd %s227, 2880
        $region62: #{resblock_nhwc.1} parent=39 // pred_fallthru
          _
      $region40: #{resblock_nhwc.1} parent=35 // pred_fallthru
        _
      %s314 = sadd.s32 %s21, 1
      %p315 = scmp.lt.s32.totalorder %s314, 2
      // Predicated region
      $region63: #{resblock_nhwc.1} parent=35 // pred_check
        %p316 = pneg %p315
      $region64: #{resblock_nhwc.1} parent=35 // pred_check_branch
        %318 = sbr.rel (%p316) target = $region66
      $region65: #{resblock_nhwc.1} parent=35 // pred_region
        %s319 = ssub.s32 1, %s215
        %s320 = smul.u32 %s314, 8
        %s321 = smul.u32 %s320, 24
        %s322 = smul.u32 %s20, 432
        %s323 = sadd.s32 %s321, %s322
        %s324 = scalar_lea.vmem %s0, %s323
        %s325 = smul.u32 %s319, 240
        %s326 = scalar_lea.vmem [#allocation2], %s325
        %s327 = scalar_lea.sflag [#allocation3], %s319
        // Predicated region
        $region67: #{resblock_nhwc.1} parent=65 // pred_check
          _
        $region68: #{resblock_nhwc.1} parent=65 // pred_check_branch
          %329 = sbr.rel (0) target = $region70
        $region69: #{resblock_nhwc.1} parent=65 // pred_region
          %s330 = scalar_lea.vmem %s324, 16
          %s331 = scalar_lea.vmem %s326, 16 [#allocation2]
          loop: start=0, step=1, limit=1
          $region71: #{resblock_nhwc.1} parent=69 // loop_pre_header
            _
          $region72: #{resblock_nhwc.1} parent=69 // loop_header
            %s333 = sphi 0, %s337
            %p334 = scmp.ge.s32.totalorder %s333, 1
            %s338 = sphi %s324, %s324
            %s339 = sphi %s326, %s326
          $region73: #{resblock_nhwc.1} parent=69 // loop_header_branch
            %336 = sbr.rel (%p334) target = $region77
          $region74: #{resblock_nhwc.1} parent=69 // loop_body
            %v340 = vld [vmem:[%s338] sm:$0xff]
            %341 = vst [vmem:[%s339] sm:$0xff] %v340
            %v342 = vld [vmem:[%s338 + $0x8] sm:$0xff]
            %343 = vst [vmem:[%s339 + $0x8] sm:$0xff] %v342
            %v344 = vld [vmem:[%s338 + $0x18] sm:$0xff]
            %345 = vst [vmem:[%s339 + $0x18] sm:$0xff] %v344
            %v346 = vld [vmem:[%s338 + $0x20] sm:$0xff]
            %347 = vst [vmem:[%s339 + $0x20] sm:$0xff] %v346
            %v348 = vld [vmem:[%s338 + $0x30] sm:$0xff]
            %349 = vst [vmem:[%s339 + $0x30] sm:$0xff] %v348
            %v350 = vld [vmem:[%s338 + $0x38] sm:$0xff]
            %351 = vst [vmem:[%s339 + $0x38] sm:$0xff] %v350
            %v352 = vld [vmem:[%s338 + $0x48] sm:$0xff]
            %353 = vst [vmem:[%s339 + $0x48] sm:$0xff] %v352
            %v354 = vld [vmem:[%s338 + $0x50] sm:$0xff]
            %355 = vst [vmem:[%s339 + $0x50] sm:$0xff] %v354
            %v356 = vld [vmem:[%s338 + $0x60] sm:$0xff]
            %357 = vst [vmem:[%s339 + $0x60] sm:$0xff] %v356
            %v358 = vld [vmem:[%s338 + $0x68] sm:$0xff]
            %359 = vst [vmem:[%s339 + $0x68] sm:$0xff] %v358
            %v360 = vld [vmem:[%s338 + $0x78] sm:$0xff]
            %361 = vst [vmem:[%s339 + $0x78] sm:$0xff] %v360
            %v362 = vld [vmem:[%s338 + $0x80] sm:$0xff]
            %363 = vst [vmem:[%s339 + $0x80] sm:$0xff] %v362
            %v364 = vld [vmem:[%s338 + $0x90] sm:$0xff]
            %365 = vst [vmem:[%s339 + $0x90] sm:$0xff] %v364
            %v366 = vld [vmem:[%s338 + $0x98] sm:$0xff]
            %367 = vst [vmem:[%s339 + $0x98] sm:$0xff] %v366
            %v368 = vld [vmem:[%s338 + $0xa8] sm:$0xff]
            %369 = vst [vmem:[%s339 + $0xa8] sm:$0xff] %v368
            %v370 = vld [vmem:[%s338 + $0xb0] sm:$0xff]
            %371 = vst [vmem:[%s339 + $0xb0] sm:$0xff] %v370
            %v372 = vld [vmem:[%s338 + $0xc0] sm:$0xff]
            %373 = vst [vmem:[%s339 + $0xc0] sm:$0xff] %v372
            %v374 = vld [vmem:[%s338 + $0xc8] sm:$0xff]
            %375 = vst [vmem:[%s339 + $0xc8] sm:$0xff] %v374
            %v376 = vld [vmem:[%s338 + $0xd8] sm:$0xff]
            %377 = vst [vmem:[%s339 + $0xd8] sm:$0xff] %v376
            %v378 = vld [vmem:[%s338 + $0xe0] sm:$0xff]
            %379 = vst [vmem:[%s339 + $0xe0] sm:$0xff] %v378
          $region75: #{resblock_nhwc.1} parent=69 // loop_footer
            %s337 = sadd.s32 1, %s333
          $region76: #{resblock_nhwc.1} parent=69 // loop_footer_branch
            %332 = sbr.rel target = $region72
          $region77: #{resblock_nhwc.1} parent=69 // loop_exit
            _
          %s381 = ssub.s32 4, 1
          loop: start=0, step=1, limit=1
          $region78: #{resblock_nhwc.1} parent=69 // loop_pre_header
            _
          $region79: #{resblock_nhwc.1} parent=69 // loop_header
            %s383 = sphi 0, %s387
            %p384 = scmp.ge.s32.totalorder %s383, 1
            %s388 = sphi %s330, %s330
            %s389 = sphi %s331, %s331
          $region80: #{resblock_nhwc.1} parent=69 // loop_header_branch
            %386 = sbr.rel (%p384) target = $region84
          $region81: #{resblock_nhwc.1} parent=69 // loop_body
            %v390 = vld [vmem:[%s388] sm:%s381]
            %391 = vst [vmem:[%s389] sm:%s381] %v390
            %v392 = vld [vmem:[%s388 + $0x18] sm:%s381]
            %393 = vst [vmem:[%s389 + $0x18] sm:%s381] %v392
            %v394 = vld [vmem:[%s388 + $0x30] sm:%s381]
            %395 = vst [vmem:[%s389 + $0x30] sm:%s381] %v394
            %v396 = vld [vmem:[%s388 + $0x48] sm:%s381]
            %397 = vst [vmem:[%s389 + $0x48] sm:%s381] %v396
            %v398 = vld [vmem:[%s388 + $0x60] sm:%s381]
            %399 = vst [vmem:[%s389 + $0x60] sm:%s381] %v398
            %v400 = vld [vmem:[%s388 + $0x78] sm:%s381]
            %401 = vst [vmem:[%s389 + $0x78] sm:%s381] %v400
            %v402 = vld [vmem:[%s388 + $0x90] sm:%s381]
            %403 = vst [vmem:[%s389 + $0x90] sm:%s381] %v402
            %v404 = vld [vmem:[%s388 + $0xa8] sm:%s381]
            %405 = vst [vmem:[%s389 + $0xa8] sm:%s381] %v404
            %v406 = vld [vmem:[%s388 + $0xc0] sm:%s381]
            %407 = vst [vmem:[%s389 + $0xc0] sm:%s381] %v406
            %v408 = vld [vmem:[%s388 + $0xd8] sm:%s381]
            %409 = vst [vmem:[%s389 + $0xd8] sm:%s381] %v408
          $region82: #{resblock_nhwc.1} parent=69 // loop_footer
            %s387 = sadd.s32 1, %s383
          $region83: #{resblock_nhwc.1} parent=69 // loop_footer_branch
            %382 = sbr.rel target = $region79
          $region84: #{resblock_nhwc.1} parent=69 // loop_exit
            _
        $region70: #{resblock_nhwc.1} parent=65 // pred_fallthru
          _
        // Predicated region
        $region85: #{resblock_nhwc.1} parent=65 // pred_check
          _
        $region86: #{resblock_nhwc.1} parent=65 // pred_check_branch
          %412 = sbr.rel (0) target = $region88
        $region87: #{resblock_nhwc.1} parent=65 // pred_region
          %413 = vsyncadd %s327, 2880
        $region88: #{resblock_nhwc.1} parent=65 // pred_fallthru
          _
      $region66: #{resblock_nhwc.1} parent=35 // pred_fallthru
        _
      %s414 = smul.u32 %s215, 240
      %s415 = scalar_lea.vmem [#allocation2], %s414
      %s416 = scalar_lea.sflag [#allocation3], %s215
      %s417 = smul.u32 10, 18
      %s418 = smul.u32 %s417, 1
      %s419 = sshll.u32 %s418, 4
      %420 = dma.done %s416, %s419
      %v421 = vld [vmem:[%s415] sm:$0xff]
      %v422 = vld [vmem:[%s415 + $0x8] sm:$0xff]
      %v423 = vld [vmem:[%s415 + $0x10] sm:$0x3]
      %v424 = vld [vmem:[%s415 + $0x18] sm:$0xff]
      %v425 = vld [vmem:[%s415 + $0x20] sm:$0xff]
      %v426 = vld [vmem:[%s415 + $0x28] sm:$0x3]
      %v427 = vld [vmem:[%s415 + $0x30] sm:$0xff]
      %v428 = vld [vmem:[%s415 + $0x38] sm:$0xff]
      %v429 = vld [vmem:[%s415 + $0x40] sm:$0x3]
      %v430 = vld [vmem:[%s415 + $0x48] sm:$0xff]
      %v431 = vld [vmem:[%s415 + $0x50] sm:$0xff]
      %v432 = vld [vmem:[%s415 + $0x58] sm:$0x3]
      %v433 = vld [vmem:[%s415 + $0x60] sm:$0xff]
      %v434 = vld [vmem:[%s415 + $0x68] sm:$0xff]
      %v435 = vld [vmem:[%s415 + $0x70] sm:$0x3]
      %v436 = vld [vmem:[%s415 + $0x78] sm:$0xff]
      %v437 = vld [vmem:[%s415 + $0x80] sm:$0xff]
      %v438 = vld [vmem:[%s415 + $0x88] sm:$0x3]
      %v439 = vld [vmem:[%s415 + $0x90] sm:$0xff]
      %v440 = vld [vmem:[%s415 + $0x98] sm:$0xff]
      %v441 = vld [vmem:[%s415 + $0xa0] sm:$0x3]
      %v442 = vld [vmem:[%s415 + $0xa8] sm:$0xff]
      %v443 = vld [vmem:[%s415 + $0xb0] sm:$0xff]
      %v444 = vld [vmem:[%s415 + $0xb8] sm:$0x3]
      %v445 = vld [vmem:[%s415 + $0xc0] sm:$0xff]
      %v446 = vld [vmem:[%s415 + $0xc8] sm:$0xff]
      %v447 = vld [vmem:[%s415 + $0xd0] sm:$0x3]
      %v448 = vld [vmem:[%s415 + $0xd8] sm:$0xff]
      %v449 = vld [vmem:[%s415 + $0xe0] sm:$0xff]
      %v450 = vld [vmem:[%s415 + $0xe8] sm:$0x3]
      %v451 = vmax.f32 %v421, 0.0
      %v452 = vmax.f32 %v422, 0.0
      %v453 = vmax.f32 %v423, 0.0
      %v454 = vmax.f32 %v424, 0.0
      %v455 = vmax.f32 %v425, 0.0
      %v456 = vmax.f32 %v426, 0.0
      %v457 = vmax.f32 %v427, 0.0
      %v458 = vmax.f32 %v428, 0.0
      %v459 = vmax.f32 %v429, 0.0
      %v460 = vmax.f32 %v430, 0.0
      %v461 = vmax.f32 %v431, 0.0
      %v462 = vmax.f32 %v432, 0.0
      %v463 = vmax.f32 %v433, 0.0
      %v464 = vmax.f32 %v434, 0.0
      %v465 = vmax.f32 %v435, 0.0
      %v466 = vmax.f32 %v436, 0.0
      %v467 = vmax.f32 %v437, 0.0
      %v468 = vmax.f32 %v438, 0.0
      %v469 = vmax.f32 %v439, 0.0
      %v470 = vmax.f32 %v440, 0.0
      %v471 = vmax.f32 %v441, 0.0
      %v472 = vmax.f32 %v442, 0.0
      %v473 = vmax.f32 %v443, 0.0
      %v474 = vmax.f32 %v444, 0.0
      %v475 = vmax.f32 %v445, 0.0
      %v476 = vmax.f32 %v446, 0.0
      %v477 = vmax.f32 %v447, 0.0
      %v478 = vmax.f32 %v448, 0.0
      %v479 = vmax.f32 %v449, 0.0
      %v480 = vmax.f32 %v450, 0.0
      %v481 = vpack.c.bf16 %v451, %v451
      %v482 = vpack.c.bf16 %v452, %v452
      %v483 = vpack.c.bf16 %v453, %v453
      %v484 = vpack.c.bf16 %v454, %v454
      %v485 = vpack.c.bf16 %v455, %v455
      %v486 = vpack.c.bf16 %v456, %v456
      %v487 = vpack.c.bf16 %v457, %v457
      %v488 = vpack.c.bf16 %v458, %v458
      %v489 = vpack.c.bf16 %v459, %v459
      %v490 = vpack.c.bf16 %v460, %v460
      %v491 = vpack.c.bf16 %v461, %v461
      %v492 = vpack.c.bf16 %v462, %v462
      %v493 = vpack.c.bf16 %v463, %v463
      %v494 = vpack.c.bf16 %v464, %v464
      %v495 = vpack.c.bf16 %v465, %v465
      %v496 = vpack.c.bf16 %v466, %v466
      %v497 = vpack.c.bf16 %v467, %v467
      %v498 = vpack.c.bf16 %v468, %v468
      %v499 = vpack.c.bf16 %v469, %v469
      %v500 = vpack.c.bf16 %v470, %v470
      %v501 = vpack.c.bf16 %v471, %v471
      %v502 = vpack.c.bf16 %v472, %v472
      %v503 = vpack.c.bf16 %v473, %v473
      %v504 = vpack.c.bf16 %v474, %v474
      %v505 = vpack.c.bf16 %v475, %v475
      %v506 = vpack.c.bf16 %v476, %v476
      %v507 = vpack.c.bf16 %v477, %v477
      %v508 = vpack.c.bf16 %v478, %v478
      %v509 = vpack.c.bf16 %v479, %v479
      %v510 = vpack.c.bf16 %v480, %v480
      %v527 = vunpack.c.l.b16 %v481
      %v528 = vunpack.c.l.b16 %v482
      %v529 = vunpack.c.l.b16 %v484
      %v530 = vunpack.c.l.b16 %v485
      %v531 = vunpack.c.l.b16 %v487
      %v532 = vunpack.c.l.b16 %v488
      %v533 = vunpack.c.l.b16 %v490
      %v534 = vunpack.c.l.b16 %v491
      %v535 = vunpack.c.l.b16 %v493
      %v536 = vunpack.c.l.b16 %v494
      %v537 = vunpack.c.l.b16 %v496
      %v538 = vunpack.c.l.b16 %v497
      %v539 = vunpack.c.l.b16 %v499
      %v540 = vunpack.c.l.b16 %v500
      %v541 = vunpack.c.l.b16 %v502
      %v542 = vunpack.c.l.b16 %v503
      %v543 = vpack.c.b16 %v528, %v527
      %v544 = vpack.c.b16 %v530, %v529
      %v545 = vpack.c.b16 %v532, %v531
      %v546 = vpack.c.b16 %v534, %v533
      %v547 = vpack.c.b16 %v536, %v535
      %v548 = vpack.c.b16 %v538, %v537
      %v549 = vpack.c.b16 %v540, %v539
      %v550 = vpack.c.b16 %v542, %v541
      %v567 = vunpack.c.l.b16 %v483
      %v568 = vunpack.c.l.b16 %v486
      %v569 = vunpack.c.l.b16 %v489
      %v570 = vunpack.c.l.b16 %v492
      %v571 = vunpack.c.l.b16 %v495
      %v572 = vunpack.c.l.b16 %v498
      %v573 = vunpack.c.l.b16 %v501
      %v574 = vunpack.c.l.b16 %v504
      %v575 = vpack.c.b16 %v567, %v567
      %v576 = vpack.c.b16 %v568, %v568
      %v577 = vpack.c.b16 %v569, %v569
      %v578 = vpack.c.b16 %v570, %v570
      %v579 = vpack.c.b16 %v571, %v571
      %v580 = vpack.c.b16 %v572, %v572
      %v581 = vpack.c.b16 %v573, %v573
      %v582 = vpack.c.b16 %v574, %v574
      %vm583 = vsmask.f32 7424
      %v585 = vshrl.u32 %v543, 16
      %v587 = vshll.u32 %v543, 16
      %v589 = vrot.slane %v587, 1
      %v590 = vor.u32 %v585, %v589
      %v592 = vshll.u32 %v575, 16
      %v594 = vrot.slane %v592, 1
      %v595 = vsel %vm583, %v590, %v594
      %v597 = vshrl.u32 %v544, 16
      %v599 = vshll.u32 %v544, 16
      %v601 = vrot.slane %v599, 1
      %v602 = vor.u32 %v597, %v601
      %v604 = vshll.u32 %v576, 16
      %v606 = vrot.slane %v604, 1
      %v607 = vsel %vm583, %v602, %v606
      %v609 = vshrl.u32 %v545, 16
      %v611 = vshll.u32 %v545, 16
      %v613 = vrot.slane %v611, 1
      %v614 = vor.u32 %v609, %v613
      %v616 = vshll.u32 %v577, 16
      %v618 = vrot.slane %v616, 1
      %v619 = vsel %vm583, %v614, %v618
      %v621 = vshrl.u32 %v546, 16
      %v623 = vshll.u32 %v546, 16
      %v625 = vrot.slane %v623, 1
      %v626 = vor.u32 %v621, %v625
      %v628 = vshll.u32 %v578, 16
      %v630 = vrot.slane %v628, 1
      %v631 = vsel %vm583, %v626, %v630
      %v633 = vshrl.u32 %v547, 16
      %v635 = vshll.u32 %v547, 16
      %v637 = vrot.slane %v635, 1
      %v638 = vor.u32 %v633, %v637
      %v640 = vshll.u32 %v579, 16
      %v642 = vrot.slane %v640, 1
      %v643 = vsel %vm583, %v638, %v642
      %v645 = vshrl.u32 %v548, 16
      %v647 = vshll.u32 %v548, 16
      %v649 = vrot.slane %v647, 1
      %v650 = vor.u32 %v645, %v649
      %v652 = vshll.u32 %v580, 16
      %v654 = vrot.slane %v652, 1
      %v655 = vsel %vm583, %v650, %v654
      %v657 = vshrl.u32 %v549, 16
      %v659 = vshll.u32 %v549, 16
      %v661 = vrot.slane %v659, 1
      %v662 = vor.u32 %v657, %v661
      %v664 = vshll.u32 %v581, 16
      %v666 = vrot.slane %v664, 1
      %v667 = vsel %vm583, %v662, %v666
      %v669 = vshrl.u32 %v550, 16
      %v671 = vshll.u32 %v550, 16
      %v673 = vrot.slane %v671, 1
      %v674 = vor.u32 %v669, %v673
      %v676 = vshll.u32 %v582, 16
      %v678 = vrot.slane %v676, 1
      %v679 = vsel %vm583, %v674, %v678
      %vm688 = vcmask 1046528
      %v689 = vrot.slane %v543, 1
      %v690 = vrot.slane %v575, 1
      %v691 = vsel %vm688, %v689, %v690
      %v692 = vrot.slane %v544, 1
      %v693 = vrot.slane %v576, 1
      %v694 = vsel %vm688, %v692, %v693
      %v695 = vrot.slane %v545, 1
      %v696 = vrot.slane %v577, 1
      %v697 = vsel %vm688, %v695, %v696
      %v698 = vrot.slane %v546, 1
      %v699 = vrot.slane %v578, 1
      %v700 = vsel %vm688, %v698, %v699
      %v701 = vrot.slane %v547, 1
      %v702 = vrot.slane %v579, 1
      %v703 = vsel %vm688, %v701, %v702
      %v704 = vrot.slane %v548, 1
      %v705 = vrot.slane %v580, 1
      %v706 = vsel %vm688, %v704, %v705
      %v707 = vrot.slane %v549, 1
      %v708 = vrot.slane %v581, 1
      %v709 = vsel %vm688, %v707, %v708
      %v710 = vrot.slane %v550, 1
      %v711 = vrot.slane %v582, 1
      %v712 = vsel %vm688, %v710, %v711
      %v721 = vld [vmem:[%s1] sm:$0xf]
      %v722 = vld [vmem:[%s1 + $0x4] sm:$0xf]
      %v723 = vld [vmem:[%s1 + $0x8] sm:$0xf]
      %v724 = vld [vmem:[%s1 + $0xc] sm:$0xf]
      %v725 = vld [vmem:[%s1 + $0x10] sm:$0xf]
      %v726 = vld [vmem:[%s1 + $0x14] sm:$0xf]
      %v727 = vld [vmem:[%s1 + $0x18] sm:$0xf]
      %v728 = vld [vmem:[%s1 + $0x1c] sm:$0xf]
      %v729 = vld [vmem:[%s1 + $0x20] sm:$0xf]
      %v730 = vld [vmem:[%s1 + $0x24] sm:$0xf]
      %v731 = vld [vmem:[%s1 + $0x28] sm:$0xf]
      %v732 = vld [vmem:[%s1 + $0x2c] sm:$0xf]
      %v733 = vld [vmem:[%s1 + $0x30] sm:$0xf]
      %v734 = vld [vmem:[%s1 + $0x34] sm:$0xf]
      %v735 = vld [vmem:[%s1 + $0x38] sm:$0xf]
      %v736 = vld [vmem:[%s1 + $0x3c] sm:$0xf]
      %v737 = vld [vmem:[%s1 + $0x40] sm:$0xf]
      %v738 = vld [vmem:[%s1 + $0x44] sm:$0xf]
      %v739 = vld [vmem:[%s1 + $0x48] sm:$0xf]
      %v740 = vld [vmem:[%s1 + $0x4c] sm:$0xf]
      %v741 = vld [vmem:[%s1 + $0x50] sm:$0xf]
      %v742 = vld [vmem:[%s1 + $0x54] sm:$0xf]
      %v743 = vld [vmem:[%s1 + $0x58] sm:$0xf]
      %v744 = vld [vmem:[%s1 + $0x5c] sm:$0xf]
      %v745 = vld [vmem:[%s1 + $0x60] sm:$0xf]
      %v746 = vld [vmem:[%s1 + $0x64] sm:$0xf]
      %v747 = vld [vmem:[%s1 + $0x68] sm:$0xf]
      %v748 = vld [vmem:[%s1 + $0x6c] sm:$0xf]
      %v749 = vld [vmem:[%s1 + $0x70] sm:$0xf]
      %v750 = vld [vmem:[%s1 + $0x74] sm:$0xf]
      %v751 = vld [vmem:[%s1 + $0x78] sm:$0xf]
      %v752 = vld [vmem:[%s1 + $0x7c] sm:$0xf]
      %v753 = vld [vmem:[%s1 + $0x80] sm:$0xf]
      %v754 = vld [vmem:[%s1 + $0x84] sm:$0xf]
      %v755 = vld [vmem:[%s1 + $0x88] sm:$0xf]
      %v756 = vld [vmem:[%s1 + $0x8c] sm:$0xf]
      %v757 = vld [vmem:[%s1 + $0x90] sm:$0xf]
      %v758 = vld [vmem:[%s1 + $0x94] sm:$0xf]
      %v759 = vld [vmem:[%s1 + $0x98] sm:$0xf]
      %v760 = vld [vmem:[%s1 + $0x9c] sm:$0xf]
      %v761 = vld [vmem:[%s1 + $0xa0] sm:$0xf]
      %v762 = vld [vmem:[%s1 + $0xa4] sm:$0xf]
      %v763 = vld [vmem:[%s1 + $0xa8] sm:$0xf]
      %v764 = vld [vmem:[%s1 + $0xac] sm:$0xf]
      %v765 = vld [vmem:[%s1 + $0xb0] sm:$0xf]
      %v766 = vld [vmem:[%s1 + $0xb4] sm:$0xf]
      %v767 = vld [vmem:[%s1 + $0xb8] sm:$0xf]
      %v768 = vld [vmem:[%s1 + $0xbc] sm:$0xf]
      %v771 = vunpack.c.l.b16 %v505
      %v772 = vunpack.c.l.b16 %v506
      %v773 = vpack.c.b16 %v772, %v771
      %v776 = vunpack.c.l.b16 %v507
      %v777 = vpack.c.b16 %v776, %v776
      %v779 = vshrl.u32 %v773, 16
      %v781 = vshll.u32 %v773, 16
      %v783 = vrot.slane %v781, 1
      %v784 = vor.u32 %v779, %v783
      %v786 = vshll.u32 %v777, 16
      %v788 = vrot.slane %v786, 1
      %v789 = vsel %vm583, %v784, %v788
      %v791 = vrot.slane %v773, 1
      %v792 = vrot.slane %v777, 1
      %v793 = vsel %vm688, %v791, %v792
      %s795 = scalar_lea.vmem %s1, 192
      %v796 = vld [vmem:[%s795] sm:$0xf]
      %v797 = vld [vmem:[%s795 + $0x4] sm:$0xf]
      %v798 = vld [vmem:[%s795 + $0x8] sm:$0xf]
      %v799 = vld [vmem:[%s795 + $0xc] sm:$0xf]
      %v800 = vld [vmem:[%s795 + $0x10] sm:$0xf]
      %v801 = vld [vmem:[%s795 + $0x14] sm:$0xf]
      %v802 = vld [vmem:[%s795 + $0x18] sm:$0xf]
      %v803 = vld [vmem:[%s795 + $0x1c] sm:$0xf]
      %v804 = vld [vmem:[%s795 + $0x20] sm:$0xf]
      %v805 = vld [vmem:[%s795 + $0x24] sm:$0xf]
      %v806 = vld [vmem:[%s795 + $0x28] sm:$0xf]
      %v807 = vld [vmem:[%s795 + $0x2c] sm:$0xf]
      %v808 = vld [vmem:[%s795 + $0x30] sm:$0xf]
      %v809 = vld [vmem:[%s795 + $0x34] sm:$0xf]
      %v810 = vld [vmem:[%s795 + $0x38] sm:$0xf]
      %v811 = vld [vmem:[%s795 + $0x3c] sm:$0xf]
      %v812 = vld [vmem:[%s795 + $0x40] sm:$0xf]
      %v813 = vld [vmem:[%s795 + $0x44] sm:$0xf]
      %v814 = vld [vmem:[%s795 + $0x48] sm:$0xf]
      %v815 = vld [vmem:[%s795 + $0x4c] sm:$0xf]
      %v816 = vld [vmem:[%s795 + $0x50] sm:$0xf]
      %v817 = vld [vmem:[%s795 + $0x54] sm:$0xf]
      %v818 = vld [vmem:[%s795 + $0x58] sm:$0xf]
      %v819 = vld [vmem:[%s795 + $0x5c] sm:$0xf]
      %v820 = vld [vmem:[%s795 + $0x60] sm:$0xf]
      %v821 = vld [vmem:[%s795 + $0x64] sm:$0xf]
      %v822 = vld [vmem:[%s795 + $0x68] sm:$0xf]
      %v823 = vld [vmem:[%s795 + $0x6c] sm:$0xf]
      %v824 = vld [vmem:[%s795 + $0x70] sm:$0xf]
      %v825 = vld [vmem:[%s795 + $0x74] sm:$0xf]
      %v826 = vld [vmem:[%s795 + $0x78] sm:$0xf]
      %v827 = vld [vmem:[%s795 + $0x7c] sm:$0xf]
      %v828 = vld [vmem:[%s795 + $0x80] sm:$0xf]
      %v829 = vld [vmem:[%s795 + $0x84] sm:$0xf]
      %v830 = vld [vmem:[%s795 + $0x88] sm:$0xf]
      %v831 = vld [vmem:[%s795 + $0x8c] sm:$0xf]
      %v832 = vld [vmem:[%s795 + $0x90] sm:$0xf]
      %v833 = vld [vmem:[%s795 + $0x94] sm:$0xf]
      %v834 = vld [vmem:[%s795 + $0x98] sm:$0xf]
      %v835 = vld [vmem:[%s795 + $0x9c] sm:$0xf]
      %v836 = vld [vmem:[%s795 + $0xa0] sm:$0xf]
      %v837 = vld [vmem:[%s795 + $0xa4] sm:$0xf]
      %v838 = vld [vmem:[%s795 + $0xa8] sm:$0xf]
      %v839 = vld [vmem:[%s795 + $0xac] sm:$0xf]
      %v840 = vld [vmem:[%s795 + $0xb0] sm:$0xf]
      %v841 = vld [vmem:[%s795 + $0xb4] sm:$0xf]
      %v842 = vld [vmem:[%s795 + $0xb8] sm:$0xf]
      %v843 = vld [vmem:[%s795 + $0xbc] sm:$0xf]
      %v892 = vunpack.c.l.b16 %v796
      %v893 = vunpack.c.l.b16 %v797
      %v894 = vunpack.c.l.b16 %v798
      %v895 = vunpack.c.l.b16 %v799
      %v896 = vunpack.c.l.b16 %v800
      %v897 = vunpack.c.l.b16 %v801
      %v898 = vunpack.c.l.b16 %v802
      %v899 = vunpack.c.l.b16 %v803
      %v900 = vunpack.c.l.b16 %v804
      %v901 = vunpack.c.l.b16 %v805
      %v902 = vunpack.c.l.b16 %v806
      %v903 = vunpack.c.l.b16 %v807
      %v904 = vunpack.c.l.b16 %v808
      %v905 = vunpack.c.l.b16 %v809
      %v906 = vunpack.c.l.b16 %v810
      %v907 = vunpack.c.l.b16 %v811
      %v908 = vunpack.c.l.b16 %v812
      %v909 = vunpack.c.l.b16 %v813
      %v910 = vunpack.c.l.b16 %v814
      %v911 = vunpack.c.l.b16 %v815
      %v912 = vunpack.c.l.b16 %v816
      %v913 = vunpack.c.l.b16 %v817
      %v914 = vunpack.c.l.b16 %v818
      %v915 = vunpack.c.l.b16 %v819
      %v916 = vunpack.c.l.b16 %v820
      %v917 = vunpack.c.l.b16 %v821
      %v918 = vunpack.c.l.b16 %v822
      %v919 = vunpack.c.l.b16 %v823
      %v920 = vunpack.c.l.b16 %v824
      %v921 = vunpack.c.l.b16 %v825
      %v922 = vunpack.c.l.b16 %v826
      %v923 = vunpack.c.l.b16 %v827
      %v924 = vunpack.c.l.b16 %v828
      %v925 = vunpack.c.l.b16 %v829
      %v926 = vunpack.c.l.b16 %v830
      %v927 = vunpack.c.l.b16 %v831
      %v928 = vunpack.c.l.b16 %v832
      %v929 = vunpack.c.l.b16 %v833
      %v930 = vunpack.c.l.b16 %v834
      %v931 = vunpack.c.l.b16 %v835
      %v932 = vunpack.c.l.b16 %v836
      %v933 = vunpack.c.l.b16 %v837
      %v934 = vunpack.c.l.b16 %v838
      %v935 = vunpack.c.l.b16 %v839
      %v936 = vunpack.c.l.b16 %v840
      %v937 = vunpack.c.l.b16 %v841
      %v938 = vunpack.c.l.b16 %v842
      %v939 = vunpack.c.l.b16 %v843
      %v940 = vpack.c.b16 %v893, %v892
      %v941 = vpack.c.b16 %v895, %v894
      %v942 = vpack.c.b16 %v897, %v896
      %v943 = vpack.c.b16 %v899, %v898
      %v944 = vpack.c.b16 %v901, %v900
      %v945 = vpack.c.b16 %v903, %v902
      %v946 = vpack.c.b16 %v905, %v904
      %v947 = vpack.c.b16 %v907, %v906
      %v948 = vpack.c.b16 %v909, %v908
      %v949 = vpack.c.b16 %v911, %v910
      %v950 = vpack.c.b16 %v913, %v912
      %v951 = vpack.c.b16 %v915, %v914
      %v952 = vpack.c.b16 %v917, %v916
      %v953 = vpack.c.b16 %v919, %v918
      %v954 = vpack.c.b16 %v921, %v920
      %v955 = vpack.c.b16 %v923, %v922
      %v956 = vpack.c.b16 %v925, %v924
      %v957 = vpack.c.b16 %v927, %v926
      %v958 = vpack.c.b16 %v929, %v928
      %v959 = vpack.c.b16 %v931, %v930
      %v960 = vpack.c.b16 %v933, %v932
      %v961 = vpack.c.b16 %v935, %v934
      %v962 = vpack.c.b16 %v937, %v936
      %v963 = vpack.c.b16 %v939, %v938
      %988 = vmatpush.bf16.msra.mxu0 %v947
      %989 = vmatpush.bf16.msra.mxu0 %v946
      %990 = vmatpush.bf16.msra.mxu0 %v945
      %991 = vmatpush.bf16.msra.mxu0 %v944
      %992 = vmatpush.bf16.msra.mxu0 %v943
      %993 = vmatpush.bf16.msra.mxu0 %v942
      %994 = vmatpush.bf16.msra.mxu0 %v941
      %995 = vmatpush.bf16.msra.mxu0 %v940
      %996 = vmatmul.bf16.gmra.mxu0 %v544
      %v997 = vpop.f32.mrf.mxu0
      %v998 = vadd.f32 0.0, %v997
      %v999 = vpop.f32.mrf.mxu0
      %v1000 = vadd.f32 0.0, %v999
      %1001 = vmatmul.bf16.gmra.mxu0 %v545
      %v1002 = vpop.f32.mrf.mxu0
      %v1003 = vadd.f32 0.0, %v1002
      %v1004 = vpop.f32.mrf.mxu0
      %v1005 = vadd.f32 0.0, %v1004
      %1006 = vmatmul.bf16.gmra.mxu0 %v546
      %v1007 = vpop.f32.mrf.mxu0
      %v1008 = vadd.f32 0.0, %v1007
      %v1009 = vpop.f32.mrf.mxu0
      %v1010 = vadd.f32 0.0, %v1009
      %1011 = vmatmul.bf16.gmra.mxu0 %v547
      %v1012 = vpop.f32.mrf.mxu0
      %v1013 = vadd.f32 0.0, %v1012
      %v1014 = vpop.f32.mrf.mxu0
      %v1015 = vadd.f32 0.0, %v1014
      %1016 = vmatmul.bf16.gmra.mxu0 %v548
      %v1017 = vpop.f32.mrf.mxu0
      %v1018 = vadd.f32 0.0, %v1017
      %v1019 = vpop.f32.mrf.mxu0
      %v1020 = vadd.f32 0.0, %v1019
      %1021 = vmatmul.bf16.gmra.mxu0 %v549
      %v1022 = vpop.f32.mrf.mxu0
      %v1023 = vadd.f32 0.0, %v1022
      %v1024 = vpop.f32.mrf.mxu0
      %v1025 = vadd.f32 0.0, %v1024
      %1026 = vmatmul.bf16.gmra.mxu0 %v550
      %v1027 = vpop.f32.mrf.mxu0
      %v1028 = vadd.f32 0.0, %v1027
      %v1029 = vpop.f32.mrf.mxu0
      %v1030 = vadd.f32 0.0, %v1029
      %1031 = vmatmul.bf16.gmra.mxu0 %v773
      %v1032 = vpop.f32.mrf.mxu0
      %v1033 = vadd.f32 0.0, %v1032
      %v1034 = vpop.f32.mrf.mxu0
      %v1035 = vadd.f32 0.0, %v1034
      %1036 = vdwg.mxu0
      %1037 = vmatpush.bf16.msra.mxu0 %v955
      %1038 = vmatpush.bf16.msra.mxu0 %v954
      %1039 = vmatpush.bf16.msra.mxu0 %v953
      %1040 = vmatpush.bf16.msra.mxu0 %v952
      %1041 = vmatpush.bf16.msra.mxu0 %v951
      %1042 = vmatpush.bf16.msra.mxu0 %v950
      %1043 = vmatpush.bf16.msra.mxu0 %v949
      %1044 = vmatpush.bf16.msra.mxu0 %v948
      %1045 = vmatmul.bf16.gmra.mxu0 %v607
      %v1046 = vpop.f32.mrf.mxu0
      %v1047 = vadd.f32 %v998, %v1046
      %v1048 = vpop.f32.mrf.mxu0
      %v1049 = vadd.f32 %v1000, %v1048
      %1050 = vmatmul.bf16.gmra.mxu0 %v619
      %v1051 = vpop.f32.mrf.mxu0
      %v1052 = vadd.f32 %v1003, %v1051
      %v1053 = vpop.f32.mrf.mxu0
      %v1054 = vadd.f32 %v1005, %v1053
      %1055 = vmatmul.bf16.gmra.mxu0 %v631
      %v1056 = vpop.f32.mrf.mxu0
      %v1057 = vadd.f32 %v1008, %v1056
      %v1058 = vpop.f32.mrf.mxu0
      %v1059 = vadd.f32 %v1010, %v1058
      %1060 = vmatmul.bf16.gmra.mxu0 %v643
      %v1061 = vpop.f32.mrf.mxu0
      %v1062 = vadd.f32 %v1013, %v1061
      %v1063 = vpop.f32.mrf.mxu0
      %v1064 = vadd.f32 %v1015, %v1063
      %1065 = vmatmul.bf16.gmra.mxu0 %v655
      %v1066 = vpop.f32.mrf.mxu0
      %v1067 = vadd.f32 %v1018, %v1066
      %v1068 = vpop.f32.mrf.mxu0
      %v1069 = vadd.f32 %v1020, %v1068
      %1070 = vmatmul.bf16.gmra.mxu0 %v667
      %v1071 = vpop.f32.mrf.mxu0
      %v1072 = vadd.f32 %v1023, %v1071
      %v1073 = vpop.f32.mrf.mxu0
      %v1074 = vadd.f32 %v1025, %v1073
      %1075 = vmatmul.bf16.gmra.mxu0 %v679
      %v1076 = vpop.f32.mrf.mxu0
      %v1077 = vadd.f32 %v1028, %v1076
      %v1078 = vpop.f32.mrf.mxu0
      %v1079 = vadd.f32 %v1030, %v1078
      %1080 = vmatmul.bf16.gmra.mxu0 %v789
      %v1081 = vpop.f32.mrf.mxu0
      %v1082 = vadd.f32 %v1033, %v1081
      %v1083 = vpop.f32.mrf.mxu0
      %v1084 = vadd.f32 %v1035, %v1083
      %1085 = vdwg.mxu0
      %1086 = vmatpush.bf16.msra.mxu0 %v963
      %1087 = vmatpush.bf16.msra.mxu0 %v962
      %1088 = vmatpush.bf16.msra.mxu0 %v961
      %1089 = vmatpush.bf16.msra.mxu0 %v960
      %1090 = vmatpush.bf16.msra.mxu0 %v959
      %1091 = vmatpush.bf16.msra.mxu0 %v958
      %1092 = vmatpush.bf16.msra.mxu0 %v957
      %1093 = vmatpush.bf16.msra.mxu0 %v956
      %1094 = vmatmul.bf16.gmra.mxu0 %v694
      %v1095 = vpop.f32.mrf.mxu0
      %v1096 = vadd.f32 %v1047, %v1095
      %v1097 = vpop.f32.mrf.mxu0
      %v1098 = vadd.f32 %v1049, %v1097
      %1099 = vmatmul.bf16.gmra.mxu0 %v697
      %v1100 = vpop.f32.mrf.mxu0
      %v1101 = vadd.f32 %v1052, %v1100
      %v1102 = vpop.f32.mrf.mxu0
      %v1103 = vadd.f32 %v1054, %v1102
      %1104 = vmatmul.bf16.gmra.mxu0 %v700
      %v1105 = vpop.f32.mrf.mxu0
      %v1106 = vadd.f32 %v1057, %v1105
      %v1107 = vpop.f32.mrf.mxu0
      %v1108 = vadd.f32 %v1059, %v1107
      %1109 = vmatmul.bf16.gmra.mxu0 %v703
      %v1110 = vpop.f32.mrf.mxu0
      %v1111 = vadd.f32 %v1062, %v1110
      %v1112 = vpop.f32.mrf.mxu0
      %v1113 = vadd.f32 %v1064, %v1112
      %1114 = vmatmul.bf16.gmra.mxu0 %v706
      %v1115 = vpop.f32.mrf.mxu0
      %v1116 = vadd.f32 %v1067, %v1115
      %v1117 = vpop.f32.mrf.mxu0
      %v1118 = vadd.f32 %v1069, %v1117
      %1119 = vmatmul.bf16.gmra.mxu0 %v709
      %v1120 = vpop.f32.mrf.mxu0
      %v1121 = vadd.f32 %v1072, %v1120
      %v1122 = vpop.f32.mrf.mxu0
      %v1123 = vadd.f32 %v1074, %v1122
      %1124 = vmatmul.bf16.gmra.mxu0 %v712
      %v1125 = vpop.f32.mrf.mxu0
      %v1126 = vadd.f32 %v1077, %v1125
      %v1127 = vpop.f32.mrf.mxu0
      %v1128 = vadd.f32 %v1079, %v1127
      %1129 = vmatmul.bf16.gmra.mxu0 %v793
      %v1130 = vpop.f32.mrf.mxu0
      %v1131 = vadd.f32 %v1082, %v1130
      %v1132 = vpop.f32.mrf.mxu0
      %v1133 = vadd.f32 %v1084, %v1132
      %1134 = vdwg.mxu0
      %v1183 = vunpack.c.l.b16 %v721
      %v1184 = vunpack.c.l.b16 %v722
      %v1185 = vunpack.c.l.b16 %v723
      %v1186 = vunpack.c.l.b16 %v724
      %v1187 = vunpack.c.l.b16 %v725
      %v1188 = vunpack.c.l.b16 %v726
      %v1189 = vunpack.c.l.b16 %v727
      %v1190 = vunpack.c.l.b16 %v728
      %v1191 = vunpack.c.l.b16 %v729
      %v1192 = vunpack.c.l.b16 %v730
      %v1193 = vunpack.c.l.b16 %v731
      %v1194 = vunpack.c.l.b16 %v732
      %v1195 = vunpack.c.l.b16 %v733
      %v1196 = vunpack.c.l.b16 %v734
      %v1197 = vunpack.c.l.b16 %v735
      %v1198 = vunpack.c.l.b16 %v736
      %v1199 = vunpack.c.l.b16 %v737
      %v1200 = vunpack.c.l.b16 %v738
      %v1201 = vunpack.c.l.b16 %v739
      %v1202 = vunpack.c.l.b16 %v740
      %v1203 = vunpack.c.l.b16 %v741
      %v1204 = vunpack.c.l.b16 %v742
      %v1205 = vunpack.c.l.b16 %v743
      %v1206 = vunpack.c.l.b16 %v744
      %v1207 = vunpack.c.l.b16 %v745
      %v1208 = vunpack.c.l.b16 %v746
      %v1209 = vunpack.c.l.b16 %v747
      %v1210 = vunpack.c.l.b16 %v748
      %v1211 = vunpack.c.l.b16 %v749
      %v1212 = vunpack.c.l.b16 %v750
      %v1213 = vunpack.c.l.b16 %v751
      %v1214 = vunpack.c.l.b16 %v752
      %v1215 = vunpack.c.l.b16 %v753
      %v1216 = vunpack.c.l.b16 %v754
      %v1217 = vunpack.c.l.b16 %v755
      %v1218 = vunpack.c.l.b16 %v756
      %v1219 = vunpack.c.l.b16 %v757
      %v1220 = vunpack.c.l.b16 %v758
      %v1221 = vunpack.c.l.b16 %v759
      %v1222 = vunpack.c.l.b16 %v760
      %v1223 = vunpack.c.l.b16 %v761
      %v1224 = vunpack.c.l.b16 %v762
      %v1225 = vunpack.c.l.b16 %v763
      %v1226 = vunpack.c.l.b16 %v764
      %v1227 = vunpack.c.l.b16 %v765
      %v1228 = vunpack.c.l.b16 %v766
      %v1229 = vunpack.c.l.b16 %v767
      %v1230 = vunpack.c.l.b16 %v768
      %v1231 = vpack.c.b16 %v1184, %v1183
      %v1232 = vpack.c.b16 %v1186, %v1185
      %v1233 = vpack.c.b16 %v1188, %v1187
      %v1234 = vpack.c.b16 %v1190, %v1189
      %v1235 = vpack.c.b16 %v1192, %v1191
      %v1236 = vpack.c.b16 %v1194, %v1193
      %v1237 = vpack.c.b16 %v1196, %v1195
      %v1238 = vpack.c.b16 %v1198, %v1197
      %v1239 = vpack.c.b16 %v1200, %v1199
      %v1240 = vpack.c.b16 %v1202, %v1201
      %v1241 = vpack.c.b16 %v1204, %v1203
      %v1242 = vpack.c.b16 %v1206, %v1205
      %v1243 = vpack.c.b16 %v1208, %v1207
      %v1244 = vpack.c.b16 %v1210, %v1209
      %v1245 = vpack.c.b16 %v1212, %v1211
      %v1246 = vpack.c.b16 %v1214, %v1213
      %v1247 = vpack.c.b16 %v1216, %v1215
      %v1248 = vpack.c.b16 %v1218, %v1217
      %v1249 = vpack.c.b16 %v1220, %v1219
      %v1250 = vpack.c.b16 %v1222, %v1221
      %v1251 = vpack.c.b16 %v1224, %v1223
      %v1252 = vpack.c.b16 %v1226, %v1225
      %v1253 = vpack.c.b16 %v1228, %v1227
      %v1254 = vpack.c.b16 %v1230, %v1229
      %1279 = vmatpush.bf16.msra.mxu0 %v1238
      %1280 = vmatpush.bf16.msra.mxu0 %v1237
      %1281 = vmatpush.bf16.msra.mxu0 %v1236
      %1282 = vmatpush.bf16.msra.mxu0 %v1235
      %1283 = vmatpush.bf16.msra.mxu0 %v1234
      %1284 = vmatpush.bf16.msra.mxu0 %v1233
      %1285 = vmatpush.bf16.msra.mxu0 %v1232
      %1286 = vmatpush.bf16.msra.mxu0 %v1231
      %1287 = vmatmul.bf16.gmra.mxu0 %v543
      %v1288 = vpop.f32.mrf.mxu0
      %v1289 = vadd.f32 %v1096, %v1288
      %v1290 = vpop.f32.mrf.mxu0
      %v1291 = vadd.f32 %v1098, %v1290
      %1292 = vmatmul.bf16.gmra.mxu0 %v544
      %v1293 = vpop.f32.mrf.mxu0
      %v1294 = vadd.f32 %v1101, %v1293
      %v1295 = vpop.f32.mrf.mxu0
      %v1296 = vadd.f32 %v1103, %v1295
      %1297 = vmatmul.bf16.gmra.mxu0 %v545
      %v1298 = vpop.f32.mrf.mxu0
      %v1299 = vadd.f32 %v1106, %v1298
      %v1300 = vpop.f32.mrf.mxu0
      %v1301 = vadd.f32 %v1108, %v1300
      %1302 = vmatmul.bf16.gmra.mxu0 %v546
      %v1303 = vpop.f32.mrf.mxu0
      %v1304 = vadd.f32 %v1111, %v1303
      %v1305 = vpop.f32.mrf.mxu0
      %v1306 = vadd.f32 %v1113, %v1305
      %1307 = vmatmul.bf16.gmra.mxu0 %v547
      %v1308 = vpop.f32.mrf.mxu0
      %v1309 = vadd.f32 %v1116, %v1308
      %v1310 = vpop.f32.mrf.mxu0
      %v1311 = vadd.f32 %v1118, %v1310
      %1312 = vmatmul.bf16.gmra.mxu0 %v548
      %v1313 = vpop.f32.mrf.mxu0
      %v1314 = vadd.f32 %v1121, %v1313
      %v1315 = vpop.f32.mrf.mxu0
      %v1316 = vadd.f32 %v1123, %v1315
      %1317 = vmatmul.bf16.gmra.mxu0 %v549
      %v1318 = vpop.f32.mrf.mxu0
      %v1319 = vadd.f32 %v1126, %v1318
      %v1320 = vpop.f32.mrf.mxu0
      %v1321 = vadd.f32 %v1128, %v1320
      %1322 = vmatmul.bf16.gmra.mxu0 %v550
      %v1323 = vpop.f32.mrf.mxu0
      %v1324 = vadd.f32 %v1131, %v1323
      %v1325 = vpop.f32.mrf.mxu0
      %v1326 = vadd.f32 %v1133, %v1325
      %1327 = vdwg.mxu0
      %1328 = vmatpush.bf16.msra.mxu0 %v1246
      %1329 = vmatpush.bf16.msra.mxu0 %v1245
      %1330 = vmatpush.bf16.msra.mxu0 %v1244
      %1331 = vmatpush.bf16.msra.mxu0 %v1243
      %1332 = vmatpush.bf16.msra.mxu0 %v1242
      %1333 = vmatpush.bf16.msra.mxu0 %v1241
      %1334 = vmatpush.bf16.msra.mxu0 %v1240
      %1335 = vmatpush.bf16.msra.mxu0 %v1239
      %1336 = vmatmul.bf16.gmra.mxu0 %v595
      %v1337 = vpop.f32.mrf.mxu0
      %v1338 = vadd.f32 %v1289, %v1337
      %v1339 = vpop.f32.mrf.mxu0
      %v1340 = vadd.f32 %v1291, %v1339
      %1341 = vmatmul.bf16.gmra.mxu0 %v607
      %v1342 = vpop.f32.mrf.mxu0
      %v1343 = vadd.f32 %v1294, %v1342
      %v1344 = vpop.f32.mrf.mxu0
      %v1345 = vadd.f32 %v1296, %v1344
      %1346 = vmatmul.bf16.gmra.mxu0 %v619
      %v1347 = vpop.f32.mrf.mxu0
      %v1348 = vadd.f32 %v1299, %v1347
      %v1349 = vpop.f32.mrf.mxu0
      %v1350 = vadd.f32 %v1301, %v1349
      %1351 = vmatmul.bf16.gmra.mxu0 %v631
      %v1352 = vpop.f32.mrf.mxu0
      %v1353 = vadd.f32 %v1304, %v1352
      %v1354 = vpop.f32.mrf.mxu0
      %v1355 = vadd.f32 %v1306, %v1354
      %1356 = vmatmul.bf16.gmra.mxu0 %v643
      %v1357 = vpop.f32.mrf.mxu0
      %v1358 = vadd.f32 %v1309, %v1357
      %v1359 = vpop.f32.mrf.mxu0
      %v1360 = vadd.f32 %v1311, %v1359
      %1361 = vmatmul.bf16.gmra.mxu0 %v655
      %v1362 = vpop.f32.mrf.mxu0
      %v1363 = vadd.f32 %v1314, %v1362
      %v1364 = vpop.f32.mrf.mxu0
      %v1365 = vadd.f32 %v1316, %v1364
      %1366 = vmatmul.bf16.gmra.mxu0 %v667
      %v1367 = vpop.f32.mrf.mxu0
      %v1368 = vadd.f32 %v1319, %v1367
      %v1369 = vpop.f32.mrf.mxu0
      %v1370 = vadd.f32 %v1321, %v1369
      %1371 = vmatmul.bf16.gmra.mxu0 %v679
      %v1372 = vpop.f32.mrf.mxu0
      %v1373 = vadd.f32 %v1324, %v1372
      %v1374 = vpop.f32.mrf.mxu0
      %v1375 = vadd.f32 %v1326, %v1374
      %1376 = vdwg.mxu0
      %1377 = vmatpush.bf16.msra.mxu0 %v1254
      %1378 = vmatpush.bf16.msra.mxu0 %v1253
      %1379 = vmatpush.bf16.msra.mxu0 %v1252
      %1380 = vmatpush.bf16.msra.mxu0 %v1251
      %1381 = vmatpush.bf16.msra.mxu0 %v1250
      %1382 = vmatpush.bf16.msra.mxu0 %v1249
      %1383 = vmatpush.bf16.msra.mxu0 %v1248
      %1384 = vmatpush.bf16.msra.mxu0 %v1247
      %1385 = vmatmul.bf16.gmra.mxu0 %v691
      %v1386 = vpop.f32.mrf.mxu0
      %v1387 = vadd.f32 %v1338, %v1386
      %v1388 = vpop.f32.mrf.mxu0
      %v1389 = vadd.f32 %v1340, %v1388
      %1390 = vmatmul.bf16.gmra.mxu0 %v694
      %v1391 = vpop.f32.mrf.mxu0
      %v1392 = vadd.f32 %v1343, %v1391
      %v1393 = vpop.f32.mrf.mxu0
      %v1394 = vadd.f32 %v1345, %v1393
      %1395 = vmatmul.bf16.gmra.mxu0 %v697
      %v1396 = vpop.f32.mrf.mxu0
      %v1397 = vadd.f32 %v1348, %v1396
      %v1398 = vpop.f32.mrf.mxu0
      %v1399 = vadd.f32 %v1350, %v1398
      %1400 = vmatmul.bf16.gmra.mxu0 %v700
      %v1401 = vpop.f32.mrf.mxu0
      %v1402 = vadd.f32 %v1353, %v1401
      %v1403 = vpop.f32.mrf.mxu0
      %v1404 = vadd.f32 %v1355, %v1403
      %1405 = vmatmul.bf16.gmra.mxu0 %v703
      %v1406 = vpop.f32.mrf.mxu0
      %v1407 = vadd.f32 %v1358, %v1406
      %v1408 = vpop.f32.mrf.mxu0
      %v1409 = vadd.f32 %v1360, %v1408
      %1410 = vmatmul.bf16.gmra.mxu0 %v706
      %v1411 = vpop.f32.mrf.mxu0
      %v1412 = vadd.f32 %v1363, %v1411
      %v1413 = vpop.f32.mrf.mxu0
      %v1414 = vadd.f32 %v1365, %v1413
      %1415 = vmatmul.bf16.gmra.mxu0 %v709
      %v1416 = vpop.f32.mrf.mxu0
      %v1417 = vadd.f32 %v1368, %v1416
      %v1418 = vpop.f32.mrf.mxu0
      %v1419 = vadd.f32 %v1370, %v1418
      %1420 = vmatmul.bf16.gmra.mxu0 %v712
      %v1421 = vpop.f32.mrf.mxu0
      %v1422 = vadd.f32 %v1373, %v1421
      %v1423 = vpop.f32.mrf.mxu0
      %v1424 = vadd.f32 %v1375, %v1423
      %1425 = vdwg.mxu0
      %v1428 = vunpack.c.l.b16 %v508
      %v1429 = vunpack.c.l.b16 %v509
      %v1430 = vpack.c.b16 %v1429, %v1428
      %v1433 = vunpack.c.l.b16 %v510
      %v1434 = vpack.c.b16 %v1433, %v1433
      %v1436 = vshrl.u32 %v1430, 16
      %v1438 = vshll.u32 %v1430, 16
      %v1440 = vrot.slane %v1438, 1
      %v1441 = vor.u32 %v1436, %v1440
      %v1443 = vshll.u32 %v1434, 16
      %v1445 = vrot.slane %v1443, 1
      %v1446 = vsel %vm583, %v1441, %v1445
      %v1448 = vrot.slane %v1430, 1
      %v1449 = vrot.slane %v1434, 1
      %v1450 = vsel %vm688, %v1448, %v1449
      %s1452 = scalar_lea.vmem %s1, 384
      %v1453 = vld [vmem:[%s1452] sm:$0xf]
      %v1454 = vld [vmem:[%s1452 + $0x4] sm:$0xf]
      %v1455 = vld [vmem:[%s1452 + $0x8] sm:$0xf]
      %v1456 = vld [vmem:[%s1452 + $0xc] sm:$0xf]
      %v1457 = vld [vmem:[%s1452 + $0x10] sm:$0xf]
      %v1458 = vld [vmem:[%s1452 + $0x14] sm:$0xf]
      %v1459 = vld [vmem:[%s1452 + $0x18] sm:$0xf]
      %v1460 = vld [vmem:[%s1452 + $0x1c] sm:$0xf]
      %v1461 = vld [vmem:[%s1452 + $0x20] sm:$0xf]
      %v1462 = vld [vmem:[%s1452 + $0x24] sm:$0xf]
      %v1463 = vld [vmem:[%s1452 + $0x28] sm:$0xf]
      %v1464 = vld [vmem:[%s1452 + $0x2c] sm:$0xf]
      %v1465 = vld [vmem:[%s1452 + $0x30] sm:$0xf]
      %v1466 = vld [vmem:[%s1452 + $0x34] sm:$0xf]
      %v1467 = vld [vmem:[%s1452 + $0x38] sm:$0xf]
      %v1468 = vld [vmem:[%s1452 + $0x3c] sm:$0xf]
      %v1469 = vld [vmem:[%s1452 + $0x40] sm:$0xf]
      %v1470 = vld [vmem:[%s1452 + $0x44] sm:$0xf]
      %v1471 = vld [vmem:[%s1452 + $0x48] sm:$0xf]
      %v1472 = vld [vmem:[%s1452 + $0x4c] sm:$0xf]
      %v1473 = vld [vmem:[%s1452 + $0x50] sm:$0xf]
      %v1474 = vld [vmem:[%s1452 + $0x54] sm:$0xf]
      %v1475 = vld [vmem:[%s1452 + $0x58] sm:$0xf]
      %v1476 = vld [vmem:[%s1452 + $0x5c] sm:$0xf]
      %v1477 = vld [vmem:[%s1452 + $0x60] sm:$0xf]
      %v1478 = vld [vmem:[%s1452 + $0x64] sm:$0xf]
      %v1479 = vld [vmem:[%s1452 + $0x68] sm:$0xf]
      %v1480 = vld [vmem:[%s1452 + $0x6c] sm:$0xf]
      %v1481 = vld [vmem:[%s1452 + $0x70] sm:$0xf]
      %v1482 = vld [vmem:[%s1452 + $0x74] sm:$0xf]
      %v1483 = vld [vmem:[%s1452 + $0x78] sm:$0xf]
      %v1484 = vld [vmem:[%s1452 + $0x7c] sm:$0xf]
      %v1485 = vld [vmem:[%s1452 + $0x80] sm:$0xf]
      %v1486 = vld [vmem:[%s1452 + $0x84] sm:$0xf]
      %v1487 = vld [vmem:[%s1452 + $0x88] sm:$0xf]
      %v1488 = vld [vmem:[%s1452 + $0x8c] sm:$0xf]
      %v1489 = vld [vmem:[%s1452 + $0x90] sm:$0xf]
      %v1490 = vld [vmem:[%s1452 + $0x94] sm:$0xf]
      %v1491 = vld [vmem:[%s1452 + $0x98] sm:$0xf]
      %v1492 = vld [vmem:[%s1452 + $0x9c] sm:$0xf]
      %v1493 = vld [vmem:[%s1452 + $0xa0] sm:$0xf]
      %v1494 = vld [vmem:[%s1452 + $0xa4] sm:$0xf]
      %v1495 = vld [vmem:[%s1452 + $0xa8] sm:$0xf]
      %v1496 = vld [vmem:[%s1452 + $0xac] sm:$0xf]
      %v1497 = vld [vmem:[%s1452 + $0xb0] sm:$0xf]
      %v1498 = vld [vmem:[%s1452 + $0xb4] sm:$0xf]
      %v1499 = vld [vmem:[%s1452 + $0xb8] sm:$0xf]
      %v1500 = vld [vmem:[%s1452 + $0xbc] sm:$0xf]
      %v1549 = vunpack.c.l.b16 %v1453
      %v1550 = vunpack.c.l.b16 %v1454
      %v1551 = vunpack.c.l.b16 %v1455
      %v1552 = vunpack.c.l.b16 %v1456
      %v1553 = vunpack.c.l.b16 %v1457
      %v1554 = vunpack.c.l.b16 %v1458
      %v1555 = vunpack.c.l.b16 %v1459
      %v1556 = vunpack.c.l.b16 %v1460
      %v1557 = vunpack.c.l.b16 %v1461
      %v1558 = vunpack.c.l.b16 %v1462
      %v1559 = vunpack.c.l.b16 %v1463
      %v1560 = vunpack.c.l.b16 %v1464
      %v1561 = vunpack.c.l.b16 %v1465
      %v1562 = vunpack.c.l.b16 %v1466
      %v1563 = vunpack.c.l.b16 %v1467
      %v1564 = vunpack.c.l.b16 %v1468
      %v1565 = vunpack.c.l.b16 %v1469
      %v1566 = vunpack.c.l.b16 %v1470
      %v1567 = vunpack.c.l.b16 %v1471
      %v1568 = vunpack.c.l.b16 %v1472
      %v1569 = vunpack.c.l.b16 %v1473
      %v1570 = vunpack.c.l.b16 %v1474
      %v1571 = vunpack.c.l.b16 %v1475
      %v1572 = vunpack.c.l.b16 %v1476
      %v1573 = vunpack.c.l.b16 %v1477
      %v1574 = vunpack.c.l.b16 %v1478
      %v1575 = vunpack.c.l.b16 %v1479
      %v1576 = vunpack.c.l.b16 %v1480
      %v1577 = vunpack.c.l.b16 %v1481
      %v1578 = vunpack.c.l.b16 %v1482
      %v1579 = vunpack.c.l.b16 %v1483
      %v1580 = vunpack.c.l.b16 %v1484
      %v1581 = vunpack.c.l.b16 %v1485
      %v1582 = vunpack.c.l.b16 %v1486
      %v1583 = vunpack.c.l.b16 %v1487
      %v1584 = vunpack.c.l.b16 %v1488
      %v1585 = vunpack.c.l.b16 %v1489
      %v1586 = vunpack.c.l.b16 %v1490
      %v1587 = vunpack.c.l.b16 %v1491
      %v1588 = vunpack.c.l.b16 %v1492
      %v1589 = vunpack.c.l.b16 %v1493
      %v1590 = vunpack.c.l.b16 %v1494
      %v1591 = vunpack.c.l.b16 %v1495
      %v1592 = vunpack.c.l.b16 %v1496
      %v1593 = vunpack.c.l.b16 %v1497
      %v1594 = vunpack.c.l.b16 %v1498
      %v1595 = vunpack.c.l.b16 %v1499
      %v1596 = vunpack.c.l.b16 %v1500
      %v1597 = vpack.c.b16 %v1550, %v1549
      %v1598 = vpack.c.b16 %v1552, %v1551
      %v1599 = vpack.c.b16 %v1554, %v1553
      %v1600 = vpack.c.b16 %v1556, %v1555
      %v1601 = vpack.c.b16 %v1558, %v1557
      %v1602 = vpack.c.b16 %v1560, %v1559
      %v1603 = vpack.c.b16 %v1562, %v1561
      %v1604 = vpack.c.b16 %v1564, %v1563
      %v1605 = vpack.c.b16 %v1566, %v1565
      %v1606 = vpack.c.b16 %v1568, %v1567
      %v1607 = vpack.c.b16 %v1570, %v1569
      %v1608 = vpack.c.b16 %v1572, %v1571
      %v1609 = vpack.c.b16 %v1574, %v1573
      %v1610 = vpack.c.b16 %v1576, %v1575
      %v1611 = vpack.c.b16 %v1578, %v1577
      %v1612 = vpack.c.b16 %v1580, %v1579
      %v1613 = vpack.c.b16 %v1582, %v1581
      %v1614 = vpack.c.b16 %v1584, %v1583
      %v1615 = vpack.c.b16 %v1586, %v1585
      %v1616 = vpack.c.b16 %v1588, %v1587
      %v1617 = vpack.c.b16 %v1590, %v1589
      %v1618 = vpack.c.b16 %v1592, %v1591
      %v1619 = vpack.c.b16 %v1594, %v1593
      %v1620 = vpack.c.b16 %v1596, %v1595
      %1645 = vmatpush.bf16.msra.mxu0 %v1604
      %1646 = vmatpush.bf16.msra.mxu0 %v1603
      %1647 = vmatpush.bf16.msra.mxu0 %v1602
      %1648 = vmatpush.bf16.msra.mxu0 %v1601
      %1649 = vmatpush.bf16.msra.mxu0 %v1600
      %1650 = vmatpush.bf16.msra.mxu0 %v1599
      %1651 = vmatpush.bf16.msra.mxu0 %v1598
      %1652 = vmatpush.bf16.msra.mxu0 %v1597
      %1653 = vmatmul.bf16.gmra.mxu0 %v545
      %v1654 = vpop.f32.mrf.mxu0
      %v1655 = vadd.f32 0.0, %v1654
      %v1656 = vpop.f32.mrf.mxu0
      %v1657 = vadd.f32 0.0, %v1656
      %1658 = vmatmul.bf16.gmra.mxu0 %v546
      %v1659 = vpop.f32.mrf.mxu0
      %v1660 = vadd.f32 0.0, %v1659
      %v1661 = vpop.f32.mrf.mxu0
      %v1662 = vadd.f32 0.0, %v1661
      %1663 = vmatmul.bf16.gmra.mxu0 %v547
      %v1664 = vpop.f32.mrf.mxu0
      %v1665 = vadd.f32 0.0, %v1664
      %v1666 = vpop.f32.mrf.mxu0
      %v1667 = vadd.f32 0.0, %v1666
      %1668 = vmatmul.bf16.gmra.mxu0 %v548
      %v1669 = vpop.f32.mrf.mxu0
      %v1670 = vadd.f32 0.0, %v1669
      %v1671 = vpop.f32.mrf.mxu0
      %v1672 = vadd.f32 0.0, %v1671
      %1673 = vmatmul.bf16.gmra.mxu0 %v549
      %v1674 = vpop.f32.mrf.mxu0
      %v1675 = vadd.f32 0.0, %v1674
      %v1676 = vpop.f32.mrf.mxu0
      %v1677 = vadd.f32 0.0, %v1676
      %1678 = vmatmul.bf16.gmra.mxu0 %v550
      %v1679 = vpop.f32.mrf.mxu0
      %v1680 = vadd.f32 0.0, %v1679
      %v1681 = vpop.f32.mrf.mxu0
      %v1682 = vadd.f32 0.0, %v1681
      %1683 = vmatmul.bf16.gmra.mxu0 %v773
      %v1684 = vpop.f32.mrf.mxu0
      %v1685 = vadd.f32 0.0, %v1684
      %v1686 = vpop.f32.mrf.mxu0
      %v1687 = vadd.f32 0.0, %v1686
      %1688 = vmatmul.bf16.gmra.mxu0 %v1430
      %v1689 = vpop.f32.mrf.mxu0
      %v1690 = vadd.f32 0.0, %v1689
      %v1691 = vpop.f32.mrf.mxu0
      %v1692 = vadd.f32 0.0, %v1691
      %1693 = vdwg.mxu0
      %1694 = vmatpush.bf16.msra.mxu0 %v1612
      %1695 = vmatpush.bf16.msra.mxu0 %v1611
      %1696 = vmatpush.bf16.msra.mxu0 %v1610
      %1697 = vmatpush.bf16.msra.mxu0 %v1609
      %1698 = vmatpush.bf16.msra.mxu0 %v1608
      %1699 = vmatpush.bf16.msra.mxu0 %v1607
      %1700 = vmatpush.bf16.msra.mxu0 %v1606
      %1701 = vmatpush.bf16.msra.mxu0 %v1605
      %1702 = vmatmul.bf16.gmra.mxu0 %v619
      %v1703 = vpop.f32.mrf.mxu0
      %v1704 = vadd.f32 %v1655, %v1703
      %v1705 = vpop.f32.mrf.mxu0
      %v1706 = vadd.f32 %v1657, %v1705
      %1707 = vmatmul.bf16.gmra.mxu0 %v631
      %v1708 = vpop.f32.mrf.mxu0
      %v1709 = vadd.f32 %v1660, %v1708
      %v1710 = vpop.f32.mrf.mxu0
      %v1711 = vadd.f32 %v1662, %v1710
      %1712 = vmatmul.bf16.gmra.mxu0 %v643
      %v1713 = vpop.f32.mrf.mxu0
      %v1714 = vadd.f32 %v1665, %v1713
      %v1715 = vpop.f32.mrf.mxu0
      %v1716 = vadd.f32 %v1667, %v1715
      %1717 = vmatmul.bf16.gmra.mxu0 %v655
      %v1718 = vpop.f32.mrf.mxu0
      %v1719 = vadd.f32 %v1670, %v1718
      %v1720 = vpop.f32.mrf.mxu0
      %v1721 = vadd.f32 %v1672, %v1720
      %1722 = vmatmul.bf16.gmra.mxu0 %v667
      %v1723 = vpop.f32.mrf.mxu0
      %v1724 = vadd.f32 %v1675, %v1723
      %v1725 = vpop.f32.mrf.mxu0
      %v1726 = vadd.f32 %v1677, %v1725
      %1727 = vmatmul.bf16.gmra.mxu0 %v679
      %v1728 = vpop.f32.mrf.mxu0
      %v1729 = vadd.f32 %v1680, %v1728
      %v1730 = vpop.f32.mrf.mxu0
      %v1731 = vadd.f32 %v1682, %v1730
      %1732 = vmatmul.bf16.gmra.mxu0 %v789
      %v1733 = vpop.f32.mrf.mxu0
      %v1734 = vadd.f32 %v1685, %v1733
      %v1735 = vpop.f32.mrf.mxu0
      %v1736 = vadd.f32 %v1687, %v1735
      %1737 = vmatmul.bf16.gmra.mxu0 %v1446
      %v1738 = vpop.f32.mrf.mxu0
      %v1739 = vadd.f32 %v1690, %v1738
      %v1740 = vpop.f32.mrf.mxu0
      %v1741 = vadd.f32 %v1692, %v1740
      %1742 = vdwg.mxu0
      %1743 = vmatpush.bf16.msra.mxu0 %v1620
      %1744 = vmatpush.bf16.msra.mxu0 %v1619
      %1745 = vmatpush.bf16.msra.mxu0 %v1618
      %1746 = vmatpush.bf16.msra.mxu0 %v1617
      %1747 = vmatpush.bf16.msra.mxu0 %v1616
      %1748 = vmatpush.bf16.msra.mxu0 %v1615
      %1749 = vmatpush.bf16.msra.mxu0 %v1614
      %1750 = vmatpush.bf16.msra.mxu0 %v1613
      %1751 = vmatmul.bf16.gmra.mxu0 %v697
      %v1752 = vpop.f32.mrf.mxu0
      %v1753 = vadd.f32 %v1704, %v1752
      %v1754 = vpop.f32.mrf.mxu0
      %v1755 = vadd.f32 %v1706, %v1754
      %1756 = vmatmul.bf16.gmra.mxu0 %v700
      %v1757 = vpop.f32.mrf.mxu0
      %v1758 = vadd.f32 %v1709, %v1757
      %v1759 = vpop.f32.mrf.mxu0
      %v1760 = vadd.f32 %v1711, %v1759
      %1761 = vmatmul.bf16.gmra.mxu0 %v703
      %v1762 = vpop.f32.mrf.mxu0
      %v1763 = vadd.f32 %v1714, %v1762
      %v1764 = vpop.f32.mrf.mxu0
      %v1765 = vadd.f32 %v1716, %v1764
      %1766 = vmatmul.bf16.gmra.mxu0 %v706
      %v1767 = vpop.f32.mrf.mxu0
      %v1768 = vadd.f32 %v1719, %v1767
      %v1769 = vpop.f32.mrf.mxu0
      %v1770 = vadd.f32 %v1721, %v1769
      %1771 = vmatmul.bf16.gmra.mxu0 %v709
      %v1772 = vpop.f32.mrf.mxu0
      %v1773 = vadd.f32 %v1724, %v1772
      %v1774 = vpop.f32.mrf.mxu0
      %v1775 = vadd.f32 %v1726, %v1774
      %1776 = vmatmul.bf16.gmra.mxu0 %v712
      %v1777 = vpop.f32.mrf.mxu0
      %v1778 = vadd.f32 %v1729, %v1777
      %v1779 = vpop.f32.mrf.mxu0
      %v1780 = vadd.f32 %v1731, %v1779
      %1781 = vmatmul.bf16.gmra.mxu0 %v793
      %v1782 = vpop.f32.mrf.mxu0
      %v1783 = vadd.f32 %v1734, %v1782
      %v1784 = vpop.f32.mrf.mxu0
      %v1785 = vadd.f32 %v1736, %v1784
      %1786 = vmatmul.bf16.gmra.mxu0 %v1450
      %v1787 = vpop.f32.mrf.mxu0
      %v1788 = vadd.f32 %v1739, %v1787
      %v1789 = vpop.f32.mrf.mxu0
      %v1790 = vadd.f32 %v1741, %v1789
      %1791 = vdwg.mxu0
      %v1792 = vadd.f32 %v1387, %v1753
      %v1793 = vadd.f32 %v1389, %v1755
      %v1794 = vadd.f32 %v1392, %v1758
      %v1795 = vadd.f32 %v1394, %v1760
      %v1796 = vadd.f32 %v1397, %v1763
      %v1797 = vadd.f32 %v1399, %v1765
      %v1798 = vadd.f32 %v1402, %v1768
      %v1799 = vadd.f32 %v1404, %v1770
      %v1800 = vadd.f32 %v1407, %v1773
      %v1801 = vadd.f32 %v1409, %v1775
      %v1802 = vadd.f32 %v1412, %v1778
      %v1803 = vadd.f32 %v1414, %v1780
      %v1804 = vadd.f32 %v1417, %v1783
      %v1805 = vadd.f32 %v1419, %v1785
      %v1806 = vadd.f32 %v1422, %v1788
      %v1807 = vadd.f32 %v1424, %v1790
      %v1808 = vld [vmem:[%s2] sm:$0x1]
      %v1810 = vperm.slane %v1808, 0
      %v1812 = vadd.f32 %v1792, %v1810
      %v1813 = vadd.f32 %v1793, %v1810
      %v1814 = vadd.f32 %v1794, %v1810
      %v1815 = vadd.f32 %v1795, %v1810
      %v1816 = vadd.f32 %v1796, %v1810
      %v1817 = vadd.f32 %v1797, %v1810
      %v1818 = vadd.f32 %v1798, %v1810
      %v1819 = vadd.f32 %v1799, %v1810
      %v1820 = vadd.f32 %v1800, %v1810
      %v1821 = vadd.f32 %v1801, %v1810
      %v1822 = vadd.f32 %v1802, %v1810
      %v1823 = vadd.f32 %v1803, %v1810
      %v1824 = vadd.f32 %v1804, %v1810
      %v1825 = vadd.f32 %v1805, %v1810
      %v1826 = vadd.f32 %v1806, %v1810
      %v1827 = vadd.f32 %v1807, %v1810
      %v1828 = vmax.f32 %v1812, 0.0
      %v1829 = vmax.f32 %v1813, 0.0
      %v1830 = vmax.f32 %v1814, 0.0
      %v1831 = vmax.f32 %v1815, 0.0
      %v1832 = vmax.f32 %v1816, 0.0
      %v1833 = vmax.f32 %v1817, 0.0
      %v1834 = vmax.f32 %v1818, 0.0
      %v1835 = vmax.f32 %v1819, 0.0
      %v1836 = vmax.f32 %v1820, 0.0
      %v1837 = vmax.f32 %v1821, 0.0
      %v1838 = vmax.f32 %v1822, 0.0
      %v1839 = vmax.f32 %v1823, 0.0
      %v1840 = vmax.f32 %v1824, 0.0
      %v1841 = vmax.f32 %v1825, 0.0
      %v1842 = vmax.f32 %v1826, 0.0
      %v1843 = vmax.f32 %v1827, 0.0
      %v1844 = vpack.c.bf16 %v1829, %v1828
      %v1845 = vpack.c.bf16 %v1831, %v1830
      %v1846 = vpack.c.bf16 %v1833, %v1832
      %v1847 = vpack.c.bf16 %v1835, %v1834
      %v1848 = vpack.c.bf16 %v1837, %v1836
      %v1849 = vpack.c.bf16 %v1839, %v1838
      %v1850 = vpack.c.bf16 %v1841, %v1840
      %v1851 = vpack.c.bf16 %v1843, %v1842
      %v1852 = vld [vmem:[%s3] sm:$0xf]
      %v1853 = vld [vmem:[%s3 + $0x4] sm:$0xf]
      %v1854 = vld [vmem:[%s3 + $0x8] sm:$0xf]
      %v1855 = vld [vmem:[%s3 + $0xc] sm:$0xf]
      %v1856 = vld [vmem:[%s3 + $0x10] sm:$0xf]
      %v1857 = vld [vmem:[%s3 + $0x14] sm:$0xf]
      %v1858 = vld [vmem:[%s3 + $0x18] sm:$0xf]
      %v1859 = vld [vmem:[%s3 + $0x1c] sm:$0xf]
      %v1860 = vld [vmem:[%s3 + $0x20] sm:$0xf]
      %v1861 = vld [vmem:[%s3 + $0x24] sm:$0xf]
      %v1862 = vld [vmem:[%s3 + $0x28] sm:$0xf]
      %v1863 = vld [vmem:[%s3 + $0x2c] sm:$0xf]
      %v1864 = vld [vmem:[%s3 + $0x30] sm:$0xf]
      %v1865 = vld [vmem:[%s3 + $0x34] sm:$0xf]
      %v1866 = vld [vmem:[%s3 + $0x38] sm:$0xf]
      %v1867 = vld [vmem:[%s3 + $0x3c] sm:$0xf]
      %v1868 = vld [vmem:[%s4] sm:$0x1]
      %v1870 = vperm.slane %v1868, 0
      %v1888 = vunpack.c.l.b16 %v1852
      %v1889 = vunpack.c.l.b16 %v1853
      %v1890 = vunpack.c.l.b16 %v1854
      %v1891 = vunpack.c.l.b16 %v1855
      %v1892 = vunpack.c.l.b16 %v1856
      %v1893 = vunpack.c.l.b16 %v1857
      %v1894 = vunpack.c.l.b16 %v1858
      %v1895 = vunpack.c.l.b16 %v1859
      %v1896 = vunpack.c.l.b16 %v1860
      %v1897 = vunpack.c.l.b16 %v1861
      %v1898 = vunpack.c.l.b16 %v1862
      %v1899 = vunpack.c.l.b16 %v1863
      %v1900 = vunpack.c.l.b16 %v1864
      %v1901 = vunpack.c.l.b16 %v1865
      %v1902 = vunpack.c.l.b16 %v1866
      %v1903 = vunpack.c.l.b16 %v1867
      %v1904 = vpack.c.b16 %v1889, %v1888
      %v1905 = vpack.c.b16 %v1891, %v1890
      %v1906 = vpack.c.b16 %v1893, %v1892
      %v1907 = vpack.c.b16 %v1895, %v1894
      %v1908 = vpack.c.b16 %v1897, %v1896
      %v1909 = vpack.c.b16 %v1899, %v1898
      %v1910 = vpack.c.b16 %v1901, %v1900
      %v1911 = vpack.c.b16 %v1903, %v1902
      %1920 = vmatpush.bf16.msra.mxu0 %v1911
      %1921 = vmatpush.bf16.msra.mxu0 %v1910
      %1922 = vmatpush.bf16.msra.mxu0 %v1909
      %1923 = vmatpush.bf16.msra.mxu0 %v1908
      %1924 = vmatpush.bf16.msra.mxu0 %v1907
      %1925 = vmatpush.bf16.msra.mxu0 %v1906
      %1926 = vmatpush.bf16.msra.mxu0 %v1905
      %1927 = vmatpush.bf16.msra.mxu0 %v1904
      %1928 = vmatmul.bf16.gmra.mxu0 %v1844
      %v1929 = vpop.f32.mrf.mxu0
      %v1930 = vadd.f32 %v1870, %v1929
      %v1931 = vpop.f32.mrf.mxu0
      %v1932 = vadd.f32 %v1870, %v1931
      %1933 = vmatmul.bf16.gmra.mxu0 %v1845
      %v1934 = vpop.f32.mrf.mxu0
      %v1935 = vadd.f32 %v1870, %v1934
      %v1936 = vpop.f32.mrf.mxu0
      %v1937 = vadd.f32 %v1870, %v1936
      %1938 = vmatmul.bf16.gmra.mxu0 %v1846
      %v1939 = vpop.f32.mrf.mxu0
      %v1940 = vadd.f32 %v1870, %v1939
      %v1941 = vpop.f32.mrf.mxu0
      %v1942 = vadd.f32 %v1870, %v1941
      %1943 = vmatmul.bf16.gmra.mxu0 %v1847
      %v1944 = vpop.f32.mrf.mxu0
      %v1945 = vadd.f32 %v1870, %v1944
      %v1946 = vpop.f32.mrf.mxu0
      %v1947 = vadd.f32 %v1870, %v1946
      %1948 = vmatmul.bf16.gmra.mxu0 %v1848
      %v1949 = vpop.f32.mrf.mxu0
      %v1950 = vadd.f32 %v1870, %v1949
      %v1951 = vpop.f32.mrf.mxu0
      %v1952 = vadd.f32 %v1870, %v1951
      %1953 = vmatmul.bf16.gmra.mxu0 %v1849
      %v1954 = vpop.f32.mrf.mxu0
      %v1955 = vadd.f32 %v1870, %v1954
      %v1956 = vpop.f32.mrf.mxu0
      %v1957 = vadd.f32 %v1870, %v1956
      %1958 = vmatmul.bf16.gmra.mxu0 %v1850
      %v1959 = vpop.f32.mrf.mxu0
      %v1960 = vadd.f32 %v1870, %v1959
      %v1961 = vpop.f32.mrf.mxu0
      %v1962 = vadd.f32 %v1870, %v1961
      %1963 = vmatmul.bf16.gmra.mxu0 %v1851
      %v1964 = vpop.f32.mrf.mxu0
      %v1965 = vadd.f32 %v1870, %v1964
      %v1966 = vpop.f32.mrf.mxu0
      %v1967 = vadd.f32 %v1870, %v1966
      %1968 = vdwg.mxu0
      %vm1993 = vcmask 1046528
      %v1994 = vrot.slane %v424, 1
      %v1995 = vrot.slane %v425, 1
      %v1996 = vsel %vm1993, %v1994, %v1995
      %v1997 = vrot.slane %v426, 1
      %v1998 = vsel %vm1993, %v1995, %v1997
      %v1999 = vrot.slane %v427, 1
      %v2000 = vrot.slane %v428, 1
      %v2001 = vsel %vm1993, %v1999, %v2000
      %v2002 = vrot.slane %v429, 1
      %v2003 = vsel %vm1993, %v2000, %v2002
      %v2004 = vrot.slane %v430, 1
      %v2005 = vrot.slane %v431, 1
      %v2006 = vsel %vm1993, %v2004, %v2005
      %v2007 = vrot.slane %v432, 1
      %v2008 = vsel %vm1993, %v2005, %v2007
      %v2009 = vrot.slane %v433, 1
      %v2010 = vrot.slane %v434, 1
      %v2011 = vsel %vm1993, %v2009, %v2010
      %v2012 = vrot.slane %v435, 1
      %v2013 = vsel %vm1993, %v2010, %v2012
      %v2014 = vrot.slane %v436, 1
      %v2015 = vrot.slane %v437, 1
      %v2016 = vsel %vm1993, %v2014, %v2015
      %v2017 = vrot.slane %v438, 1
      %v2018 = vsel %vm1993, %v2015, %v2017
      %v2019 = vrot.slane %v439, 1
      %v2020 = vrot.slane %v440, 1
      %v2021 = vsel %vm1993, %v2019, %v2020
      %v2022 = vrot.slane %v441, 1
      %v2023 = vsel %vm1993, %v2020, %v2022
      %v2024 = vrot.slane %v442, 1
      %v2025 = vrot.slane %v443, 1
      %v2026 = vsel %vm1993, %v2024, %v2025
      %v2027 = vrot.slane %v444, 1
      %v2028 = vsel %vm1993, %v2025, %v2027
      %v2029 = vrot.slane %v445, 1
      %v2030 = vrot.slane %v446, 1
      %v2031 = vsel %vm1993, %v2029, %v2030
      %v2032 = vrot.slane %v447, 1
      %v2033 = vsel %vm1993, %v2030, %v2032
      %v2050 = vadd.f32 %v1996, %v1930
      %v2051 = vadd.f32 %v1998, %v1932
      %v2052 = vadd.f32 %v2001, %v1935
      %v2053 = vadd.f32 %v2003, %v1937
      %v2054 = vadd.f32 %v2006, %v1940
      %v2055 = vadd.f32 %v2008, %v1942
      %v2056 = vadd.f32 %v2011, %v1945
      %v2057 = vadd.f32 %v2013, %v1947
      %v2058 = vadd.f32 %v2016, %v1950
      %v2059 = vadd.f32 %v2018, %v1952
      %v2060 = vadd.f32 %v2021, %v1955
      %v2061 = vadd.f32 %v2023, %v1957
      %v2062 = vadd.f32 %v2026, %v1960
      %v2063 = vadd.f32 %v2028, %v1962
      %v2064 = vadd.f32 %v2031, %v1965
      %v2065 = vadd.f32 %v2033, %v1967
      %2066 = vst [vmem:[%s202] sm:$0xff] %v2050
      %2067 = vst [vmem:[%s202 + $0x8] sm:$0xff] %v2051
      %2068 = vst [vmem:[%s202 + $0x10] sm:$0xff] %v2052
      %2069 = vst [vmem:[%s202 + $0x18] sm:$0xff] %v2053
      %2070 = vst [vmem:[%s202 + $0x20] sm:$0xff] %v2054
      %2071 = vst [vmem:[%s202 + $0x28] sm:$0xff] %v2055
      %2072 = vst [vmem:[%s202 + $0x30] sm:$0xff] %v2056
      %2073 = vst [vmem:[%s202 + $0x38] sm:$0xff] %v2057
      %2074 = vst [vmem:[%s202 + $0x40] sm:$0xff] %v2058
      %2075 = vst [vmem:[%s202 + $0x48] sm:$0xff] %v2059
      %2076 = vst [vmem:[%s202 + $0x50] sm:$0xff] %v2060
      %2077 = vst [vmem:[%s202 + $0x58] sm:$0xff] %v2061
      %2078 = vst [vmem:[%s202 + $0x60] sm:$0xff] %v2062
      %2079 = vst [vmem:[%s202 + $0x68] sm:$0xff] %v2063
      %2080 = vst [vmem:[%s202 + $0x70] sm:$0xff] %v2064
      %2081 = vst [vmem:[%s202 + $0x78] sm:$0xff] %v2065
      %s2082 = smul.u32 8, %s21
      %p2083 = scmp.lt.s32.totalorder %s20, 1
      %s2084 = scalar_select %p2083, %s20, 1
      %p2085 = scmp.lt.s32.totalorder %s2082, 15
      %s2086 = scalar_select %p2085, %s2082, 15
      %s2087 = smul.addr %s2086, 2
      %s2088 = smul.addr %s2084, 32
      %s2089 = sadd.s32 %s2087, %s2088
      %s2090 = smul.addr %s2089, 8
      %s2091 = scalar_lea.vmem %s5, %s2090
      // Predicated region
      $region89: #{resblock_nhwc.1} parent=35 // pred_check
        %p2092 = pneg %p132
      $region90: #{resblock_nhwc.1} parent=35 // pred_check_branch
        %2094 = sbr.rel (%p2092) target = $region92
      $region91: #{resblock_nhwc.1} parent=35 // pred_region
        %s2095 = smul.u32 8, %s21
      $region92: #{resblock_nhwc.1} parent=35 // pred_fallthru
        _
    $region36: #{resblock_nhwc.1} parent=5 // pred_fallthru
      _
    %p2096 = scmp.le.s32.totalorder 2, %s11
    // Predicated region
    $region93: #{resblock_nhwc.1} parent=5 // pred_check
      %p2097 = pneg %p2096
    $region94: #{resblock_nhwc.1} parent=5 // pred_check_branch
      %2099 = sbr.rel (%p2097) target = $region96
    $region95: #{resblock_nhwc.1} parent=5 // pred_region
      %s2100 = ssub.s32 %s11, 2
      // Predicated region
      $region97: #{resblock_nhwc.1} parent=95 // pred_check
        %p2101 = pneg %p138
      $region98: #{resblock_nhwc.1} parent=95 // pred_check_branch
        %2103 = sbr.rel (%p2101) target = $region100
      $region99: #{resblock_nhwc.1} parent=95 // pred_region
        %s2104 = smul.u32 8, %s23
        %p2105 = scmp.lt.s32.totalorder %s22, 1
        %s2106 = scalar_select %p2105, %s22, 1
        %p2107 = scmp.lt.s32.totalorder %s2104, 15
        %s2108 = scalar_select %p2107, %s2104, 15
        %s2109 = smul.addr %s2108, 2
        %s2110 = smul.addr %s2106, 32
        %s2111 = sadd.s32 %s2109, %s2110
        %s2112 = smul.addr %s2111, 8
        %s2113 = scalar_lea.vmem %s5, %s2112
      $region100: #{resblock_nhwc.1} parent=95 // pred_fallthru
        _
    $region96: #{resblock_nhwc.1} parent=5 // pred_fallthru
      _
  $region6: #{resblock_nhwc.1} parent=0 // loop_footer
    %s15 = sadd.s32 1, %s11
  $region7: #{resblock_nhwc.1} parent=0 // loop_footer_branch
    %10 = sbr.rel target = $region3
  $region8: #{resblock_nhwc.1} parent=0 // loop_exit
    _
  %2114 = vsyncmov [#allocation3]
  %s2115 = vpop.sfrf %2114
  %p2116 = scmp.eq.s32.totalorder %s2115, 0
  %p2117 = pneg %p2116
  %2119 = shalt.err (%p2117)
  %s2120 = scalar_lea.sflag [#allocation3], 1
  %2121 = vsyncmov %s2120
  %s2122 = vpop.sfrf %2121
  %p2123 = scmp.eq.s32.totalorder %s2122, 0
  %p2124 = pneg %p2123
  %2126 = shalt.err (%p2124)

</llo_original>
